<compile_context>
chip_gen: v6e
topology: v6e:2x2x1
jax: 0.10.0
libtpu: 0.0.40
codegen_flags: <defaults>
</compile_context>

<pallas_src>
import functools

import jax
import jax.numpy as jnp
from jax import lax
from jax.experimental import pallas as pl
from jax.experimental.pallas import tpu as pltpu


def _round_up(v, m):
    return (v + m - 1) // m * m


def _decoder_stage_kernel(a_ref, x_ref,
                          w1m_ref, g1_ref, be1_ref,
                          w2_ref, b2_ref, g2_ref, be2_ref,
                          o_ref, pk_ref, *, tap_starts, center, cin):
    """One batch image per grid step; all tensors are channel-major (C, pixels)."""
    kb = 9 * cin                          # real tap rows in the packed operand
    k_pack, p_pad = pk_ref.shape

    # ---- pack: nine shifted tap windows into the (K_pack, P_pad) scratch ----
    # Offsets are compile-time constants; 8 of 9 windows are lane-unaligned but
    # the rotation cost is paid once here instead of once per matmul.
    for t in range(9):
        s = tap_starts[t]
        pk_ref[t * cin:(t + 1) * cin, :] = x_ref[0, :, s:s + p_pad]
    # Bias row (ones) + zero K-padding rows.  Written every step (cheap) so the
    # scratch is valid on whichever TensorCore runs a given grid slice.
    ki = lax.broadcasted_iota(jnp.int32, (k_pack - kb, p_pad), 0)
    pk_ref[kb:, :] = jnp.where(ki == 0, 1.0, 0.0)

    # ---- deconv1 + b1: single bf16-operand matmul, f32 accumulation ---------
    h = jnp.dot(w1m_ref[...], pk_ref[...].astype(jnp.bfloat16),
                preferred_element_type=jnp.float32)

    # ---- GDN1: h * rsqrt(beta + gamma @ h^2)   (K=8 matmul stays f32) -------
    nrm = jnp.dot(g1_ref[...], h * h, preferred_element_type=jnp.float32)
    h = h * lax.rsqrt(be1_ref[...] + nrm)

    # ---- PReLU ---------------------------------------------------------------
    alpha = a_ref[0]
    h = jnp.where(h > 0, h, alpha * h)

    # ---- deconv2: 1x1 transposed conv == per-pixel channel matmul (K=8, f32) -
    h = jnp.dot(w2_ref[...], h, preferred_element_type=jnp.float32) + b2_ref[...]

    # ---- GDN2 ----------------------------------------------------------------
    nrm = jnp.dot(g2_ref[...], h * h, preferred_element_type=jnp.float32)
    h = h * lax.rsqrt(be2_ref[...] + nrm)

    # ---- residual add (lane-aligned center window) + PReLU -------------------
    h = h + x_ref[0, :, center:center + p_pad]
    o_ref[0] = jnp.where(h > 0, h, alpha * h)


def decoder_stage_forward(x_nchw, params):
    """Fused Decoder_stage forward. x_nchw: (N, Cin, H, W) float32, NCHW."""
    N, Cin, H, W = x_nchw.shape
    Cout = params["w1"].shape[1]
    assert Cin == Cout, "residual add requires in_channels == out_channels"

    Hp, Wp = H + 2, W + 2               # spatial zero ring for the 3x3 taps
    P = Hp * Wp                         # real pixels per padded image
    P_pad = _round_up(P, 128)           # lane-dense pixel axis (unmasked stores)
    MARG = _round_up(Wp + 1, 128)       # 128-aligned flat margin >= |tap offset|
    PM = MARG + P_pad + MARG            # flat length handed to the kernel

    x = x_nchw.astype(jnp.float32)
    xpad = jnp.pad(x, ((0, 0), (0, 0), (1, 1), (1, 1)))           # (N,C,Hp,Wp)
    xflat = jnp.pad(xpad.reshape(N, Cin, P),
                    ((0, 0), (0, 0), (MARG, PM - MARG - P)))      # (N,C,PM)

    # ConvTranspose2d(stride=1, pad=1) == correlation with spatially flipped,
    # channel-transposed weights.  Merge the nine taps plus a bias column into
    # one (Cout, K_pack) bf16 matrix matching the packed-scratch row layout.
    KB = 9 * Cin
    K_pack = _round_up(KB + 1, 16)      # +1 ones/bias row, bf16-friendly K
    w1f = params["w1"][:, :, ::-1, ::-1]                          # (Cin,Cout,3,3)
    w1t = jnp.transpose(w1f, (2, 3, 1, 0)).reshape(9, Cout, Cin)  # (9,Cout,Cin)
    w1m = jnp.transpose(w1t, (1, 0, 2)).reshape(Cout, KB)         # (Cout,9*Cin)
    w1m = jnp.concatenate(
        [w1m, params["b1"].reshape(Cout, 1),
         jnp.zeros((Cout, K_pack - KB - 1), jnp.float32)], axis=1)
    w1m = w1m.astype(jnp.bfloat16)                                # (Cout,K_pack)

    w2t = params["w2"][:, :, 0, 0].T                              # (Cout, Cout)
    b2 = params["b2"].reshape(Cout, 1)
    g1 = params["gamma1"]                                         # (Cout, Cout)
    g2 = params["gamma2"]
    be1 = params["beta1"].reshape(Cout, 1)
    be2 = params["beta2"].reshape(Cout, 1)
    a = params["a"].reshape(1)

    # flat offset of tap (kh, kw) relative to an output pixel; the 128-aligned
    # MARG makes the center tap and the residual window zero-cost aligned slices
    tap_starts = tuple(MARG + (kh - 1) * Wp + (kw - 1)
                       for kh in range(3) for kw in range(3))

    kernel = functools.partial(_decoder_stage_kernel,
                               tap_starts=tap_starts, center=MARG, cin=Cin)

    small = lambda r, c: pl.BlockSpec((r, c), lambda n: (0, 0))

    out_pad = pl.pallas_call(
        kernel,
        out_shape=jax.ShapeDtypeStruct((N, Cout, P_pad), jnp.float32),
        grid=(N,),
        in_specs=[
            pl.BlockSpec(memory_space=pltpu.MemorySpace.SMEM),    # PReLU slope
            pl.BlockSpec((1, Cin, PM), lambda n: (n, 0, 0)),      # padded image
            small(Cout, K_pack),                                  # merged deconv1 + b1
            small(Cout, Cout), small(Cout, 1),                    # gamma1, beta1
            small(Cout, Cout), small(Cout, 1),                    # w2, b2
            small(Cout, Cout), small(Cout, 1),                    # gamma2, beta2
        ],
        out_specs=pl.BlockSpec((1, Cout, P_pad), lambda n: (n, 0, 0)),
        scratch_shapes=[pltpu.VMEM((K_pack, P_pad), jnp.float32)],
        compiler_params=pltpu.CompilerParams(
            dimension_semantics=("parallel",),
            vmem_limit_bytes=32 * 1024 * 1024),
    )(a, xflat, w1m, g1, be1, w2t, b2, g2, be2)

    # first P lanes are the padded output grid; its interior == NCHW result
    return out_pad[:, :, :P].reshape(N, Cout, Hp, Wp)[:, :, 1:H + 1, 1:W + 1]


def init_params(key, in_channels, out_channels):
    """Deterministic synthetic parameters matching the module's __init__ shapes."""
    k = jax.random.split(key, 6)
    w1 = 0.1 * jax.random.normal(k[0], (in_channels, out_channels, 3, 3), jnp.float32)
    b1 = 0.05 * jax.random.normal(k[1], (out_channels,), jnp.float32)
    w2 = 0.1 * jax.random.normal(k[2], (out_channels, out_channels, 1, 1), jnp.float32)
    b2 = 0.05 * jax.random.normal(k[3], (out_channels,), jnp.float32)
    # GDN effective (reparameterized) params: beta -> 1, gamma -> 0.1*I at default
    # init; add a small positive jitter so the channel-mixing matmul is non-trivial.
    gamma1 = 0.1 * jnp.eye(out_channels, dtype=jnp.float32) + 0.01 * jnp.abs(
        jax.random.normal(k[4], (out_channels, out_channels), jnp.float32))
    gamma2 = 0.1 * jnp.eye(out_channels, dtype=jnp.float32) + 0.01 * jnp.abs(
        jax.random.normal(k[5], (out_channels, out_channels), jnp.float32))
    beta1 = jnp.ones((out_channels,), jnp.float32)
    beta2 = jnp.ones((out_channels,), jnp.float32)
    a = jnp.array([0.25], jnp.float32)   # nn.PReLU default init
    return dict(w1=w1, b1=b1, w2=w2, b2=b2, gamma1=gamma1, gamma2=gamma2,
                beta1=beta1, beta2=beta2, a=a)


# -------------------- pure-JAX reference (PyTorch semantics, NCHW) ------------
def _ref_conv_transpose2d_s1(x, wt, b, pad):
    # out[n,o,h,w] = b[o] + sum_{i,kh,kw} x[n,i,h+pad-kh,w+pad-kw] * wt[i,o,kh,kw]
    N, Cin, H, W = x.shape
    Cout, K = wt.shape[1], wt.shape[2]
    xp = jnp.pad(x, ((0, 0), (0, 0), (K - 1, K - 1), (K - 1, K - 1)))
    out = jnp.zeros((N, Cout, H, W), jnp.float32)
    for kh in range(K):
        for kw in range(K):
            hs = pad - kh + K - 1
            ws = pad - kw + K - 1
            sl = xp[:, :, hs:hs + H, ws:ws + W]
            out = out + jnp.einsum('nihw,io->nohw', sl, wt[:, :, kh, kw])
    return out + b[None, :, None, None]


def _ref_gdn(x, gamma, beta):
    nrm = jnp.einsum('oi,nihw->nohw', gamma, x * x) + beta[None, :, None, None]
    return x / jnp.sqrt(nrm)


def _ref_prelu(x, a):
    return jnp.where(x > 0, x, a * x)


def reference_forward(x, p):
    out = _ref_conv_transpose2d_s1(x, p["w1"], p["b1"], pad=1)
    out = _ref_gdn(out, p["gamma1"], p["beta1"])
    out = _ref_prelu(out, p["a"][0])
    out = _ref_conv_transpose2d_s1(out, p["w2"], p["b2"], pad=0)
    out = _ref_gdn(out, p["gamma2"], p["beta2"])
    out = out + x
    return _ref_prelu(out, p["a"][0])


if __name__ == "__main__":
    key = jax.random.PRNGKey(0)
    kx, kp = jax.random.split(key)

    N, C, H, W = 2, 8, 16, 16                 # in_channels == out_channels == 8
    x = jax.random.normal(kx, (N, C, H, W), dtype=jnp.float32)
    params = init_params(kp, C, C)

    out = decoder_stage_forward(x, params)
    out = jax.block_until_ready(out)

    ref = reference_forward(x, params)
    assert out.shape == (N, C, H, W)
    # bf16-operand deconv1 (f32 accumulation) stays well inside this tolerance;
    # the other matmuls and all GDN/residual math remain f32.
    max_err = float(jnp.max(jnp.abs(out - ref)))
    if not max_err < 1e-2:
        raise AssertionError(f"kernel mismatch vs reference: max abs err {max_err}")

    print("KERNEL_OK")
</pallas_src>

<mosaic_0001>
module attributes {stable_mosaic.version = 11 : i64} {
  func.func @_decoder_stage_kernel(%arg0: i32, %arg1: memref<1xf32, #tpu.memory_space<smem>>, %arg2: memref<1x8x640xf32, #tpu.memory_space<vmem>>, %arg3: memref<8x80xbf16, #tpu.memory_space<vmem>>, %arg4: memref<8x8xf32, #tpu.memory_space<vmem>>, %arg5: memref<8x1xf32, #tpu.memory_space<vmem>>, %arg6: memref<8x8xf32, #tpu.memory_space<vmem>>, %arg7: memref<8x1xf32, #tpu.memory_space<vmem>>, %arg8: memref<8x8xf32, #tpu.memory_space<vmem>>, %arg9: memref<8x1xf32, #tpu.memory_space<vmem>>, %arg10: memref<1x8x384xf32, #tpu.memory_space<vmem>>, %arg11: memref<80x384xf32, #tpu.memory_space<vmem>>) attributes {dimension_semantics = [#tpu.dimension_semantics<parallel>], iteration_bounds = array<i64: 2>, scalar_prefetch = 0 : i64, scratch_operands = 1 : i64, tpu.core_type = #tpu.core_type<tc>, window_params = [{transform_indices = @transform_0, window_bounds = array<i64: 1>}, {transform_indices = @transform_1, window_bounds = array<i64: 1, 8, 640>}, {pipeline_mode = #tpu.pipeline_mode<synchronous>, transform_indices = @transform_2, window_bounds = array<i64: 8, 80>}, {pipeline_mode = #tpu.pipeline_mode<synchronous>, transform_indices = @transform_3, window_bounds = array<i64: 8, 8>}, {pipeline_mode = #tpu.pipeline_mode<synchronous>, transform_indices = @transform_4, window_bounds = array<i64: 8, 1>}, {pipeline_mode = #tpu.pipeline_mode<synchronous>, transform_indices = @transform_5, window_bounds = array<i64: 8, 8>}, {pipeline_mode = #tpu.pipeline_mode<synchronous>, transform_indices = @transform_6, window_bounds = array<i64: 8, 1>}, {pipeline_mode = #tpu.pipeline_mode<synchronous>, transform_indices = @transform_7, window_bounds = array<i64: 8, 8>}, {pipeline_mode = #tpu.pipeline_mode<synchronous>, transform_indices = @transform_8, window_bounds = array<i64: 8, 1>}, {transform_indices = @transform_9, window_bounds = array<i64: 1, 8, 384>}]} {
    %c0 = arith.constant 0 : index
    %c0_0 = arith.constant 0 : index
    %c109 = arith.constant 109 : index
    %0 = vector.load %arg2[%c0, %c0_0, %c109] : memref<1x8x640xf32, #tpu.memory_space<vmem>>, vector<1x8x384xf32>
    %1 = vector.shape_cast %0 : vector<1x8x384xf32> to vector<8x384xf32>
    %c0_1 = arith.constant 0 : index
    %c0_2 = arith.constant 0 : index
    %2 = vector.load %arg11[%c0_1, %c0_2] : memref<80x384xf32, #tpu.memory_space<vmem>>, vector<8x384xf32>
    tpu.vector_store %arg11[%c0_1, %c0_2], %1 {strides = array<i32>} : memref<80x384xf32, #tpu.memory_space<vmem>>, vector<8x384xf32>,
    %c0_3 = arith.constant 0 : index
    %c0_4 = arith.constant 0 : index
    %c110 = arith.constant 110 : index
    %3 = vector.load %arg2[%c0_3, %c0_4, %c110] : memref<1x8x640xf32, #tpu.memory_space<vmem>>, vector<1x8x384xf32>
    %4 = vector.shape_cast %3 : vector<1x8x384xf32> to vector<8x384xf32>
    %c8 = arith.constant 8 : index
    %c0_5 = arith.constant 0 : index
    %5 = vector.load %arg11[%c8, %c0_5] : memref<80x384xf32, #tpu.memory_space<vmem>>, vector<8x384xf32>
    tpu.vector_store %arg11[%c8, %c0_5], %4 {strides = array<i32>} : memref<80x384xf32, #tpu.memory_space<vmem>>, vector<8x384xf32>,
    %c0_6 = arith.constant 0 : index
    %c0_7 = arith.constant 0 : index
    %c111 = arith.constant 111 : index
    %6 = vector.load %arg2[%c0_6, %c0_7, %c111] : memref<1x8x640xf32, #tpu.memory_space<vmem>>, vector<1x8x384xf32>
    %7 = vector.shape_cast %6 : vector<1x8x384xf32> to vector<8x384xf32>
    %c16 = arith.constant 16 : index
    %c0_8 = arith.constant 0 : index
    %8 = vector.load %arg11[%c16, %c0_8] : memref<80x384xf32, #tpu.memory_space<vmem>>, vector<8x384xf32>
    tpu.vector_store %arg11[%c16, %c0_8], %7 {strides = array<i32>} : memref<80x384xf32, #tpu.memory_space<vmem>>, vector<8x384xf32>,
    %c0_9 = arith.constant 0 : index
    %c0_10 = arith.constant 0 : index
    %c127 = arith.constant 127 : index
    %9 = vector.load %arg2[%c0_9, %c0_10, %c127] : memref<1x8x640xf32, #tpu.memory_space<vmem>>, vector<1x8x384xf32>
    %10 = vector.shape_cast %9 : vector<1x8x384xf32> to vector<8x384xf32>
    %c24 = arith.constant 24 : index
    %c0_11 = arith.constant 0 : index
    %11 = vector.load %arg11[%c24, %c0_11] : memref<80x384xf32, #tpu.memory_space<vmem>>, vector<8x384xf32>
    tpu.vector_store %arg11[%c24, %c0_11], %10 {strides = array<i32>} : memref<80x384xf32, #tpu.memory_space<vmem>>, vector<8x384xf32>,
    %c0_12 = arith.constant 0 : index
    %c0_13 = arith.constant 0 : index
    %c128 = arith.constant 128 : index
    %12 = vector.load %arg2[%c0_12, %c0_13, %c128] : memref<1x8x640xf32, #tpu.memory_space<vmem>>, vector<1x8x384xf32>
    %13 = vector.shape_cast %12 : vector<1x8x384xf32> to vector<8x384xf32>
    %c32 = arith.constant 32 : index
    %c0_14 = arith.constant 0 : index
    %14 = vector.load %arg11[%c32, %c0_14] : memref<80x384xf32, #tpu.memory_space<vmem>>, vector<8x384xf32>
    tpu.vector_store %arg11[%c32, %c0_14], %13 {strides = array<i32>} : memref<80x384xf32, #tpu.memory_space<vmem>>, vector<8x384xf32>,
    %c0_15 = arith.constant 0 : index
    %c0_16 = arith.constant 0 : index
    %c129 = arith.constant 129 : index
    %15 = vector.load %arg2[%c0_15, %c0_16, %c129] : memref<1x8x640xf32, #tpu.memory_space<vmem>>, vector<1x8x384xf32>
    %16 = vector.shape_cast %15 : vector<1x8x384xf32> to vector<8x384xf32>
    %c40 = arith.constant 40 : index
    %c0_17 = arith.constant 0 : index
    %17 = vector.load %arg11[%c40, %c0_17] : memref<80x384xf32, #tpu.memory_space<vmem>>, vector<8x384xf32>
    tpu.vector_store %arg11[%c40, %c0_17], %16 {strides = array<i32>} : memref<80x384xf32, #tpu.memory_space<vmem>>, vector<8x384xf32>,
    %c0_18 = arith.constant 0 : index
    %c0_19 = arith.constant 0 : index
    %c145 = arith.constant 145 : index
    %18 = vector.load %arg2[%c0_18, %c0_19, %c145] : memref<1x8x640xf32, #tpu.memory_space<vmem>>, vector<1x8x384xf32>
    %19 = vector.shape_cast %18 : vector<1x8x384xf32> to vector<8x384xf32>
    %c48 = arith.constant 48 : index
    %c0_20 = arith.constant 0 : index
    %20 = vector.load %arg11[%c48, %c0_20] : memref<80x384xf32, #tpu.memory_space<vmem>>, vector<8x384xf32>
    tpu.vector_store %arg11[%c48, %c0_20], %19 {strides = array<i32>} : memref<80x384xf32, #tpu.memory_space<vmem>>, vector<8x384xf32>,
    %c0_21 = arith.constant 0 : index
    %c0_22 = arith.constant 0 : index
    %c146 = arith.constant 146 : index
    %21 = vector.load %arg2[%c0_21, %c0_22, %c146] : memref<1x8x640xf32, #tpu.memory_space<vmem>>, vector<1x8x384xf32>
    %22 = vector.shape_cast %21 : vector<1x8x384xf32> to vector<8x384xf32>
    %c56 = arith.constant 56 : index
    %c0_23 = arith.constant 0 : index
    %23 = vector.load %arg11[%c56, %c0_23] : memref<80x384xf32, #tpu.memory_space<vmem>>, vector<8x384xf32>
    tpu.vector_store %arg11[%c56, %c0_23], %22 {strides = array<i32>} : memref<80x384xf32, #tpu.memory_space<vmem>>, vector<8x384xf32>,
    %c0_24 = arith.constant 0 : index
    %c0_25 = arith.constant 0 : index
    %c147 = arith.constant 147 : index
    %24 = vector.load %arg2[%c0_24, %c0_25, %c147] : memref<1x8x640xf32, #tpu.memory_space<vmem>>, vector<1x8x384xf32>
    %25 = vector.shape_cast %24 : vector<1x8x384xf32> to vector<8x384xf32>
    %c64 = arith.constant 64 : index
    %c0_26 = arith.constant 0 : index
    %26 = vector.load %arg11[%c64, %c0_26] : memref<80x384xf32, #tpu.memory_space<vmem>>, vector<8x384xf32>
    tpu.vector_store %arg11[%c64, %c0_26], %25 {strides = array<i32>} : memref<80x384xf32, #tpu.memory_space<vmem>>, vector<8x384xf32>,
    %27 = tpu.iota {dimensions = array<i32: 0>} : vector<8x384xi32>
    %c0_i32 = arith.constant 0 : i32
    %28 = vector.broadcast %c0_i32 : i32 to vector<8x384xi32>
    %29 = arith.cmpi eq, %27, %28 : vector<8x384xi32>
    %cst = arith.constant 1.000000e+00 : f32
    %cst_27 = arith.constant 0.000000e+00 : f32
    %30 = vector.broadcast %cst : f32 to vector<8x384xf32>
    %31 = vector.broadcast %cst_27 : f32 to vector<8x384xf32>
    %32 = arith.select %29, %30, %31 : vector<8x384xi1>, vector<8x384xf32>
    %c72 = arith.constant 72 : index
    %c0_28 = arith.constant 0 : index
    %33 = vector.load %arg11[%c72, %c0_28] : memref<80x384xf32, #tpu.memory_space<vmem>>, vector<8x384xf32>
    tpu.vector_store %arg11[%c72, %c0_28], %32 {strides = array<i32>} : memref<80x384xf32, #tpu.memory_space<vmem>>, vector<8x384xf32>,
    %c0_29 = arith.constant 0 : index
    %c0_30 = arith.constant 0 : index
    %34 = vector.load %arg3[%c0_29, %c0_30] : memref<8x80xbf16, #tpu.memory_space<vmem>>, vector<8x80xbf16>
    %c0_31 = arith.constant 0 : index
    %c0_32 = arith.constant 0 : index
    %35 = vector.load %arg11[%c0_31, %c0_32] : memref<80x384xf32, #tpu.memory_space<vmem>>, vector<80x384xf32>
    %36 = arith.truncf %35 : vector<80x384xf32> to vector<80x384xbf16>
    %cst_33 = arith.constant dense<0.000000e+00> : vector<8x384xf32>
    %37 = tpu.matmul %34, %36, %cst_33 {dimension_numbers = #tpu.dot_dimension_numbers<[1], [0], [0], [1], [0, 0, 1, 1], [], []>} : vector<8x80xbf16>, vector<80x384xbf16>, vector<8x384xf32> -> vector<8x384xf32>
    %c0_34 = arith.constant 0 : index
    %c0_35 = arith.constant 0 : index
    %38 = vector.load %arg4[%c0_34, %c0_35] : memref<8x8xf32, #tpu.memory_space<vmem>>, vector<8x8xf32>
    %39 = arith.mulf %37, %37 : vector<8x384xf32>
    %cst_36 = arith.constant dense<0.000000e+00> : vector<8x384xf32>
    %40 = tpu.matmul %38, %39, %cst_36 {dimension_numbers = #tpu.dot_dimension_numbers<[1], [0], [0], [1], [0, 0, 1, 1], [], []>} : vector<8x8xf32>, vector<8x384xf32>, vector<8x384xf32> -> vector<8x384xf32>
    %c0_37 = arith.constant 0 : index
    %c0_38 = arith.constant 0 : index
    %41 = vector.load %arg5[%c0_37, %c0_38] : memref<8x1xf32, #tpu.memory_space<vmem>>, vector<8x1xf32>
    %42 = vector.broadcast %41 : vector<8x1xf32> to vector<8x384xf32>
    %43 = arith.addf %42, %40 : vector<8x384xf32>
    %44 = math.rsqrt %43 : vector<8x384xf32>
    %45 = arith.mulf %37, %44 : vector<8x384xf32>
    %c0_39 = arith.constant 0 : index
    %46 = memref.load %arg1[%c0_39] : memref<1xf32, #tpu.memory_space<smem>>
    %cst_40 = arith.constant 0.000000e+00 : f32
    %47 = vector.broadcast %cst_40 : f32 to vector<8x384xf32>
    %48 = arith.cmpf ogt, %45, %47 : vector<8x384xf32>
    %49 = vector.broadcast %46 : f32 to vector<8x384xf32>
    %50 = arith.mulf %49, %45 : vector<8x384xf32>
    %51 = arith.select %48, %45, %50 : vector<8x384xi1>, vector<8x384xf32>
    %c0_41 = arith.constant 0 : index
    %c0_42 = arith.constant 0 : index
    %52 = vector.load %arg6[%c0_41, %c0_42] : memref<8x8xf32, #tpu.memory_space<vmem>>, vector<8x8xf32>
    %cst_43 = arith.constant dense<0.000000e+00> : vector<8x384xf32>
    %53 = tpu.matmul %52, %51, %cst_43 {dimension_numbers = #tpu.dot_dimension_numbers<[1], [0], [0], [1], [0, 0, 1, 1], [], []>} : vector<8x8xf32>, vector<8x384xf32>, vector<8x384xf32> -> vector<8x384xf32>
    %c0_44 = arith.constant 0 : index
    %c0_45 = arith.constant 0 : index
    %54 = vector.load %arg7[%c0_44, %c0_45] : memref<8x1xf32, #tpu.memory_space<vmem>>, vector<8x1xf32>
    %55 = vector.broadcast %54 : vector<8x1xf32> to vector<8x384xf32>
    %56 = arith.addf %53, %55 : vector<8x384xf32>
    %c0_46 = arith.constant 0 : index
    %c0_47 = arith.constant 0 : index
    %57 = vector.load %arg8[%c0_46, %c0_47] : memref<8x8xf32, #tpu.memory_space<vmem>>, vector<8x8xf32>
    %58 = arith.mulf %56, %56 : vector<8x384xf32>
    %cst_48 = arith.constant dense<0.000000e+00> : vector<8x384xf32>
    %59 = tpu.matmul %57, %58, %cst_48 {dimension_numbers = #tpu.dot_dimension_numbers<[1], [0], [0], [1], [0, 0, 1, 1], [], []>} : vector<8x8xf32>, vector<8x384xf32>, vector<8x384xf32> -> vector<8x384xf32>
    %c0_49 = arith.constant 0 : index
    %c0_50 = arith.constant 0 : index
    %60 = vector.load %arg9[%c0_49, %c0_50] : memref<8x1xf32, #tpu.memory_space<vmem>>, vector<8x1xf32>
    %61 = vector.broadcast %60 : vector<8x1xf32> to vector<8x384xf32>
    %62 = arith.addf %61, %59 : vector<8x384xf32>
    %63 = math.rsqrt %62 : vector<8x384xf32>
    %64 = arith.mulf %56, %63 : vector<8x384xf32>
    %c0_51 = arith.constant 0 : index
    %c0_52 = arith.constant 0 : index
    %c128_53 = arith.constant 128 : index
    %65 = vector.load %arg2[%c0_51, %c0_52, %c128_53] : memref<1x8x640xf32, #tpu.memory_space<vmem>>, vector<1x8x384xf32>
    %66 = vector.shape_cast %65 : vector<1x8x384xf32> to vector<8x384xf32>
    %67 = arith.addf %64, %66 : vector<8x384xf32>
    %cst_54 = arith.constant 0.000000e+00 : f32
    %68 = vector.broadcast %cst_54 : f32 to vector<8x384xf32>
    %69 = arith.cmpf ogt, %67, %68 : vector<8x384xf32>
    %70 = vector.broadcast %46 : f32 to vector<8x384xf32>
    %71 = arith.mulf %70, %67 : vector<8x384xf32>
    %72 = arith.select %69, %67, %71 : vector<8x384xi1>, vector<8x384xf32>
    %c0_55 = arith.constant 0 : index
    %c0_56 = arith.constant 0 : index
    %c0_57 = arith.constant 0 : index
    %73 = vector.load %arg10[%c0_55, %c0_56, %c0_57] : memref<1x8x384xf32, #tpu.memory_space<vmem>>, vector<1x8x384xf32>
    %74 = vector.shape_cast %73 : vector<1x8x384xf32> to vector<8x384xf32>
    %75 = vector.shape_cast %72 : vector<8x384xf32> to vector<1x8x384xf32>
    tpu.vector_store %arg10[%c0_55, %c0_56, %c0_57], %75 {strides = array<i32>} : memref<1x8x384xf32, #tpu.memory_space<vmem>>, vector<1x8x384xf32>,
    return
  }
  func.func @transform_0(%arg0: i32) -> i32 {
    %c0_i32 = arith.constant 0 : i32
    %c0_i32_0 = arith.constant 0 : i32
    return %c0_i32 : i32
  }
  func.func @transform_1(%arg0: i32) -> (i32, i32, i32) {
    %c0_i32 = arith.constant 0 : i32
    %c0_i32_0 = arith.constant 0 : i32
    %c0_i32_1 = arith.constant 0 : i32
    return %arg0, %c0_i32, %c0_i32_0 : i32, i32, i32
  }
  func.func @transform_2(%arg0: i32) -> (i32, i32) {
    %c0_i32 = arith.constant 0 : i32
    %c0_i32_0 = arith.constant 0 : i32
    %c0_i32_1 = arith.constant 0 : i32
    return %c0_i32, %c0_i32_0 : i32, i32
  }
  func.func @transform_3(%arg0: i32) -> (i32, i32) {
    %c0_i32 = arith.constant 0 : i32
    %c0_i32_0 = arith.constant 0 : i32
    %c0_i32_1 = arith.constant 0 : i32
    return %c0_i32, %c0_i32_0 : i32, i32
  }
  func.func @transform_4(%arg0: i32) -> (i32, i32) {
    %c0_i32 = arith.constant 0 : i32
    %c0_i32_0 = arith.constant 0 : i32
    %c0_i32_1 = arith.constant 0 : i32
    return %c0_i32, %c0_i32_0 : i32, i32
  }
  func.func @transform_5(%arg0: i32) -> (i32, i32) {
    %c0_i32 = arith.constant 0 : i32
    %c0_i32_0 = arith.constant 0 : i32
    %c0_i32_1 = arith.constant 0 : i32
    return %c0_i32, %c0_i32_0 : i32, i32
  }
  func.func @transform_6(%arg0: i32) -> (i32, i32) {
    %c0_i32 = arith.constant 0 : i32
    %c0_i32_0 = arith.constant 0 : i32
    %c0_i32_1 = arith.constant 0 : i32
    return %c0_i32, %c0_i32_0 : i32, i32
  }
  func.func @transform_7(%arg0: i32) -> (i32, i32) {
    %c0_i32 = arith.constant 0 : i32
    %c0_i32_0 = arith.constant 0 : i32
    %c0_i32_1 = arith.constant 0 : i32
    return %c0_i32, %c0_i32_0 : i32, i32
  }
  func.func @transform_8(%arg0: i32) -> (i32, i32) {
    %c0_i32 = arith.constant 0 : i32
    %c0_i32_0 = arith.constant 0 : i32
    %c0_i32_1 = arith.constant 0 : i32
    return %c0_i32, %c0_i32_0 : i32, i32
  }
  func.func @transform_9(%arg0: i32) -> (i32, i32, i32) {
    %c0_i32 = arith.constant 0 : i32
    %c0_i32_0 = arith.constant 0 : i32
    %c0_i32_1 = arith.constant 0 : i32
    return %arg0, %c0_i32, %c0_i32_0 : i32, i32, i32
  }
}

</mosaic_0001>

<llo_original>
// kernel: tpu_custom_call.1
$region0: #{tpu_custom_call.1}
  #allocation0 [shape = 'u32[]', space=smem, size = 0x4, offset = 0x4, fixed_abs, tag = 'smem constant byte address 0x4 - core index']
  #allocation1 [shape = 'u32[144,128]{1,0:T(1,128)}', space=vmem, size = 0x12000, scoped, tag = 'internal scratch']
  #allocation2 [shape = 'f32[80,384]{1,0:T(8,128)}', space=vmem, size = 0x1e000, scoped, tag = 'scratch operand']
  #allocation3 [shape = 'f32[1]{0:T(128)S(6)}', space=smem, size = 0x200, scoped, tag = 'scoped memory for tpu_custom_call.1']
  %s0 = inlined_call_operand.<no memory space> [shape: f32[1], index: 0, kind: input, shape index: {}]
  %s1 = inlined_call_operand.hbm [shape: f32[2,8,640], index: 1, kind: input, shape index: {}]
  %s2 = inlined_call_operand.vmem [shape: bf16[8,80], index: 2, kind: input, shape index: {}]
  %s3 = inlined_call_operand.vmem [shape: f32[8,8], index: 3, kind: input, shape index: {}]
  %s4 = inlined_call_operand.vmem [shape: f32[8,1], index: 4, kind: input, shape index: {}]
  %s5 = inlined_call_operand.vmem [shape: f32[8,8], index: 5, kind: input, shape index: {}]
  %s6 = inlined_call_operand.vmem [shape: f32[8,1], index: 6, kind: input, shape index: {}]
  %s7 = inlined_call_operand.vmem [shape: f32[8,8], index: 7, kind: input, shape index: {}]
  %s8 = inlined_call_operand.vmem [shape: f32[8,1], index: 8, kind: input, shape index: {}]
  %s9 = inlined_call_operand.hbm [shape: f32[2,8,384], index: 9, kind: output, shape index: {}]
  %s10 = sld [smem:[#allocation0]]
  $region73: #{tpu_custom_call.1} parent=0
    _
  %s12 = ssub.s32 1, %s10
  %s13 = scalar_select 0, %s12, %s10
  %14 = sst [smem:[#allocation3]] %s0
  $region1: #{tpu_custom_call.1} parent=0
    #allocation4 [shape = 'u8[40960]{0}', space=vmem, size = 0xa000, scoped, tag = 'input window, operand 1']
    #allocation5 [shape = 's32[2]{0}', space=sflag, size = 0x8, scoped, tag = 'scoped memory for tpu_custom_call.1']
    #allocation6 [shape = 's32[2]{0}', space=sflag, size = 0x8, scoped, tag = 'scoped memory for tpu_custom_call.1']
    #allocation7 [shape = 'u8[24576]{0}', space=vmem, size = 0x6000, scoped, tag = 'output window, operand 0']
    %15 = vsyncpa [#allocation5], 0
    %s16 = scalar_lea.sflag [#allocation5], 1
    %17 = vsyncpa %s16, 0
    %18 = vsyncpa [#allocation6], 0
    %s19 = scalar_lea.sflag [#allocation6], 1
    %20 = vsyncpa %s19, 0
    loop: start=0, step=1, limit=4
    $region2: #{tpu_custom_call.1} parent=1 // loop_pre_header
      _
    $region3: #{tpu_custom_call.1} parent=1 // loop_header
      %s22 = sphi 0, %s26
      %p23 = scmp.ge.s32.totalorder %s22, 4
      %s30 = sphi 0, %s30
      %s32 = sphi 0, %s30
      %s33 = sphi 0, %s32
      %s47 = sphi 0, %s33
      %s53 = sphi 0, %s55
      %s56 = sphi 0, %s53
      %s57 = sphi 0, %s56
      %s73 = sphi 0, %s57
      %s77 = sphi 0, %s77
      %s79 = sphi 0, %s77
      %s80 = sphi 0, %s79
      %s94 = sphi 0, %s80
      %s98 = sphi 0, %s98
      %s100 = sphi 0, %s98
      %s101 = sphi 0, %s100
      %s115 = sphi 0, %s101
      %s119 = sphi 0, %s119
      %s121 = sphi 0, %s119
      %s122 = sphi 0, %s121
      %s136 = sphi 0, %s122
      %s140 = sphi 0, %s140
      %s142 = sphi 0, %s140
      %s143 = sphi 0, %s142
      %s157 = sphi 0, %s143
      %s161 = sphi 0, %s161
      %s163 = sphi 0, %s161
      %s164 = sphi 0, %s163
      %s178 = sphi 0, %s164
      %s182 = sphi 0, %s182
      %s184 = sphi 0, %s182
      %s185 = sphi 0, %s184
      %s199 = sphi 0, %s185
      %s203 = sphi 0, %s203
      %s205 = sphi 0, %s203
      %s206 = sphi 0, %s205
      %s220 = sphi 0, %s206
      %s226 = sphi 0, %s228
      %s229 = sphi 0, %s226
      %s230 = sphi 0, %s229
      %s246 = sphi 0, %s230
    $region4: #{tpu_custom_call.1} parent=1 // loop_header_branch
      %25 = sbr.rel (%p23) target = $region8
    $region5: #{tpu_custom_call.1} parent=1 // loop_body
      %s27 = ssub.s32 %s22, 1
      %s28 = ssub.s32 %s22, 2
      %s29 = sadd.s32 %s22, 1
      %s31 = sadd.s32 %s30, 1
      %p34 = scmp.eq.s32.totalorder %s22, 1
      %p35 = scmp.ne.s32.totalorder %s30, %s32
      %p36 = scmp.eq.s32.totalorder %s22, 0
      %p37 = por %p35, %p36
      %p38 = scmp.ne.s32.totalorder %s30, %s32
      %p39 = scmp.eq.s32.totalorder %s27, 1
      %p40 = por %p38, %p39
      %p41 = scmp.ne.s32.totalorder %s32, %s33
      %p42 = scmp.eq.s32.totalorder %s27, 0
      %p43 = por %p41, %p42
      %p44 = scmp.ne.s32.totalorder %s32, %s33
      %p45 = scmp.eq.s32.totalorder %s28, 1
      %p46 = por %p44, %p45
      %p48 = scmp.ne.s32.totalorder %s33, %s47
      %p49 = scmp.eq.s32.totalorder %s28, 0
      %p50 = por %p48, %p49
      %s51 = ssub.s32 %s22, %s29
      %p52 = scmp.eq.s32.totalorder %s51, 0
      %s54 = sadd.s32 %s53, 1
      %s55 = scalar_select %p52, %s53, %s54
      %p58 = pneg %p52
      %p59 = scmp.eq.s32.totalorder %s22, 1
      %p60 = por %p58, %p59
      %p61 = scmp.ne.s32.totalorder %s53, %s56
      %p62 = scmp.eq.s32.totalorder %s22, 0
      %p63 = por %p61, %p62
      %p64 = scmp.ne.s32.totalorder %s53, %s56
      %p65 = scmp.eq.s32.totalorder %s27, 1
      %p66 = por %p64, %p65
      %p67 = scmp.ne.s32.totalorder %s56, %s57
      %p68 = scmp.eq.s32.totalorder %s27, 0
      %p69 = por %p67, %p68
      %p70 = scmp.ne.s32.totalorder %s56, %s57
      %p71 = scmp.eq.s32.totalorder %s28, 1
      %p72 = por %p70, %p71
      %p74 = scmp.ne.s32.totalorder %s57, %s73
      %p75 = scmp.eq.s32.totalorder %s28, 0
      %p76 = por %p74, %p75
      %s78 = sadd.s32 %s77, 1
      %p81 = scmp.eq.s32.totalorder %s22, 1
      %p82 = scmp.ne.s32.totalorder %s77, %s79
      %p83 = scmp.eq.s32.totalorder %s22, 0
      %p84 = por %p82, %p83
      %p85 = scmp.ne.s32.totalorder %s77, %s79
      %p86 = scmp.eq.s32.totalorder %s27, 1
      %p87 = por %p85, %p86
      %p88 = scmp.ne.s32.totalorder %s79, %s80
      %p89 = scmp.eq.s32.totalorder %s27, 0
      %p90 = por %p88, %p89
      %p91 = scmp.ne.s32.totalorder %s79, %s80
      %p92 = scmp.eq.s32.totalorder %s28, 1
      %p93 = por %p91, %p92
      %p95 = scmp.ne.s32.totalorder %s80, %s94
      %p96 = scmp.eq.s32.totalorder %s28, 0
      %p97 = por %p95, %p96
      %s99 = sadd.s32 %s98, 1
      %p102 = scmp.eq.s32.totalorder %s22, 1
      %p103 = scmp.ne.s32.totalorder %s98, %s100
      %p104 = scmp.eq.s32.totalorder %s22, 0
      %p105 = por %p103, %p104
      %p106 = scmp.ne.s32.totalorder %s98, %s100
      %p107 = scmp.eq.s32.totalorder %s27, 1
      %p108 = por %p106, %p107
      %p109 = scmp.ne.s32.totalorder %s100, %s101
      %p110 = scmp.eq.s32.totalorder %s27, 0
      %p111 = por %p109, %p110
      %p112 = scmp.ne.s32.totalorder %s100, %s101
      %p113 = scmp.eq.s32.totalorder %s28, 1
      %p114 = por %p112, %p113
      %p116 = scmp.ne.s32.totalorder %s101, %s115
      %p117 = scmp.eq.s32.totalorder %s28, 0
      %p118 = por %p116, %p117
      %s120 = sadd.s32 %s119, 1
      %p123 = scmp.eq.s32.totalorder %s22, 1
      %p124 = scmp.ne.s32.totalorder %s119, %s121
      %p125 = scmp.eq.s32.totalorder %s22, 0
      %p126 = por %p124, %p125
      %p127 = scmp.ne.s32.totalorder %s119, %s121
      %p128 = scmp.eq.s32.totalorder %s27, 1
      %p129 = por %p127, %p128
      %p130 = scmp.ne.s32.totalorder %s121, %s122
      %p131 = scmp.eq.s32.totalorder %s27, 0
      %p132 = por %p130, %p131
      %p133 = scmp.ne.s32.totalorder %s121, %s122
      %p134 = scmp.eq.s32.totalorder %s28, 1
      %p135 = por %p133, %p134
      %p137 = scmp.ne.s32.totalorder %s122, %s136
      %p138 = scmp.eq.s32.totalorder %s28, 0
      %p139 = por %p137, %p138
      %s141 = sadd.s32 %s140, 1
      %p144 = scmp.eq.s32.totalorder %s22, 1
      %p145 = scmp.ne.s32.totalorder %s140, %s142
      %p146 = scmp.eq.s32.totalorder %s22, 0
      %p147 = por %p145, %p146
      %p148 = scmp.ne.s32.totalorder %s140, %s142
      %p149 = scmp.eq.s32.totalorder %s27, 1
      %p150 = por %p148, %p149
      %p151 = scmp.ne.s32.totalorder %s142, %s143
      %p152 = scmp.eq.s32.totalorder %s27, 0
      %p153 = por %p151, %p152
      %p154 = scmp.ne.s32.totalorder %s142, %s143
      %p155 = scmp.eq.s32.totalorder %s28, 1
      %p156 = por %p154, %p155
      %p158 = scmp.ne.s32.totalorder %s143, %s157
      %p159 = scmp.eq.s32.totalorder %s28, 0
      %p160 = por %p158, %p159
      %s162 = sadd.s32 %s161, 1
      %p165 = scmp.eq.s32.totalorder %s22, 1
      %p166 = scmp.ne.s32.totalorder %s161, %s163
      %p167 = scmp.eq.s32.totalorder %s22, 0
      %p168 = por %p166, %p167
      %p169 = scmp.ne.s32.totalorder %s161, %s163
      %p170 = scmp.eq.s32.totalorder %s27, 1
      %p171 = por %p169, %p170
      %p172 = scmp.ne.s32.totalorder %s163, %s164
      %p173 = scmp.eq.s32.totalorder %s27, 0
      %p174 = por %p172, %p173
      %p175 = scmp.ne.s32.totalorder %s163, %s164
      %p176 = scmp.eq.s32.totalorder %s28, 1
      %p177 = por %p175, %p176
      %p179 = scmp.ne.s32.totalorder %s164, %s178
      %p180 = scmp.eq.s32.totalorder %s28, 0
      %p181 = por %p179, %p180
      %s183 = sadd.s32 %s182, 1
      %p186 = scmp.eq.s32.totalorder %s22, 1
      %p187 = scmp.ne.s32.totalorder %s182, %s184
      %p188 = scmp.eq.s32.totalorder %s22, 0
      %p189 = por %p187, %p188
      %p190 = scmp.ne.s32.totalorder %s182, %s184
      %p191 = scmp.eq.s32.totalorder %s27, 1
      %p192 = por %p190, %p191
      %p193 = scmp.ne.s32.totalorder %s184, %s185
      %p194 = scmp.eq.s32.totalorder %s27, 0
      %p195 = por %p193, %p194
      %p196 = scmp.ne.s32.totalorder %s184, %s185
      %p197 = scmp.eq.s32.totalorder %s28, 1
      %p198 = por %p196, %p197
      %p200 = scmp.ne.s32.totalorder %s185, %s199
      %p201 = scmp.eq.s32.totalorder %s28, 0
      %p202 = por %p200, %p201
      %s204 = sadd.s32 %s203, 1
      %p207 = scmp.eq.s32.totalorder %s22, 1
      %p208 = scmp.ne.s32.totalorder %s203, %s205
      %p209 = scmp.eq.s32.totalorder %s22, 0
      %p210 = por %p208, %p209
      %p211 = scmp.ne.s32.totalorder %s203, %s205
      %p212 = scmp.eq.s32.totalorder %s27, 1
      %p213 = por %p211, %p212
      %p214 = scmp.ne.s32.totalorder %s205, %s206
      %p215 = scmp.eq.s32.totalorder %s27, 0
      %p216 = por %p214, %p215
      %p217 = scmp.ne.s32.totalorder %s205, %s206
      %p218 = scmp.eq.s32.totalorder %s28, 1
      %p219 = por %p217, %p218
      %p221 = scmp.ne.s32.totalorder %s206, %s220
      %p222 = scmp.eq.s32.totalorder %s28, 0
      %p223 = por %p221, %p222
      %s224 = ssub.s32 %s22, %s29
      %p225 = scmp.eq.s32.totalorder %s224, 0
      %s227 = sadd.s32 %s226, 1
      %s228 = scalar_select %p225, %s226, %s227
      %p231 = pneg %p225
      %p232 = scmp.eq.s32.totalorder %s22, 1
      %p233 = por %p231, %p232
      %p234 = scmp.ne.s32.totalorder %s226, %s229
      %p235 = scmp.eq.s32.totalorder %s22, 0
      %p236 = por %p234, %p235
      %p237 = scmp.ne.s32.totalorder %s226, %s229
      %p238 = scmp.eq.s32.totalorder %s27, 1
      %p239 = por %p237, %p238
      %p240 = scmp.ne.s32.totalorder %s229, %s230
      %p241 = scmp.eq.s32.totalorder %s27, 0
      %p242 = por %p240, %p241
      %p243 = scmp.ne.s32.totalorder %s229, %s230
      %p244 = scmp.eq.s32.totalorder %s28, 1
      %p245 = por %p243, %p244
      %p247 = scmp.ne.s32.totalorder %s230, %s246
      %p248 = scmp.eq.s32.totalorder %s28, 0
      %p249 = por %p247, %p248
      %p250 = scmp.le.s32.totalorder 1, %s22
      %p251 = scmp.lt.s32.totalorder %s22, 3
      %p252 = pnand %p250, %p251
      %p253 = pneg %p252
      // Predicated region
      $region9: #{tpu_custom_call.1} parent=5 // pred_check
        _
      $region10: #{tpu_custom_call.1} parent=5 // pred_check_branch
        %255 = sbr.rel (%p252) target = $region12
      $region11: #{tpu_custom_call.1} parent=5 // pred_region
        %s256 = ssub.s32 %s22, 1
        // Predicated region
        $region13: #{tpu_custom_call.1} parent=11 // pred_check
          %p257 = pneg %p43
        $region14: #{tpu_custom_call.1} parent=11 // pred_check_branch
          %259 = sbr.rel (%p257) target = $region16
        $region15: #{tpu_custom_call.1} parent=11 // pred_region
          _
        $region16: #{tpu_custom_call.1} parent=11 // pred_fallthru
          _
        // Predicated region
        $region17: #{tpu_custom_call.1} parent=11 // pred_check
          %p260 = pneg %p90
        $region18: #{tpu_custom_call.1} parent=11 // pred_check_branch
          %262 = sbr.rel (%p260) target = $region20
        $region19: #{tpu_custom_call.1} parent=11 // pred_region
          _
        $region20: #{tpu_custom_call.1} parent=11 // pred_fallthru
          _
        // Predicated region
        $region21: #{tpu_custom_call.1} parent=11 // pred_check
          %p263 = pneg %p111
        $region22: #{tpu_custom_call.1} parent=11 // pred_check_branch
          %265 = sbr.rel (%p263) target = $region24
        $region23: #{tpu_custom_call.1} parent=11 // pred_region
          _
        $region24: #{tpu_custom_call.1} parent=11 // pred_fallthru
          _
        // Predicated region
        $region25: #{tpu_custom_call.1} parent=11 // pred_check
          %p266 = pneg %p132
        $region26: #{tpu_custom_call.1} parent=11 // pred_check_branch
          %268 = sbr.rel (%p266) target = $region28
        $region27: #{tpu_custom_call.1} parent=11 // pred_region
          _
        $region28: #{tpu_custom_call.1} parent=11 // pred_fallthru
          _
        // Predicated region
        $region29: #{tpu_custom_call.1} parent=11 // pred_check
          %p269 = pneg %p153
        $region30: #{tpu_custom_call.1} parent=11 // pred_check_branch
          %271 = sbr.rel (%p269) target = $region32
        $region31: #{tpu_custom_call.1} parent=11 // pred_region
          _
        $region32: #{tpu_custom_call.1} parent=11 // pred_fallthru
          _
        // Predicated region
        $region33: #{tpu_custom_call.1} parent=11 // pred_check
          %p272 = pneg %p174
        $region34: #{tpu_custom_call.1} parent=11 // pred_check_branch
          %274 = sbr.rel (%p272) target = $region36
        $region35: #{tpu_custom_call.1} parent=11 // pred_region
          _
        $region36: #{tpu_custom_call.1} parent=11 // pred_fallthru
          _
        // Predicated region
        $region37: #{tpu_custom_call.1} parent=11 // pred_check
          %p275 = pneg %p195
        $region38: #{tpu_custom_call.1} parent=11 // pred_check_branch
          %277 = sbr.rel (%p275) target = $region40
        $region39: #{tpu_custom_call.1} parent=11 // pred_region
          _
        $region40: #{tpu_custom_call.1} parent=11 // pred_fallthru
          _
        // Predicated region
        $region41: #{tpu_custom_call.1} parent=11 // pred_check
          %p278 = pneg %p216
        $region42: #{tpu_custom_call.1} parent=11 // pred_check_branch
          %280 = sbr.rel (%p278) target = $region44
        $region43: #{tpu_custom_call.1} parent=11 // pred_region
          _
        $region44: #{tpu_custom_call.1} parent=11 // pred_fallthru
          _
      $region12: #{tpu_custom_call.1} parent=5 // pred_fallthru
        _
      %p281 = scmp.lt.s32.totalorder %s22, 2
      // Predicated region
      $region45: #{tpu_custom_call.1} parent=5 // pred_check
        %p282 = pneg %p281
      $region46: #{tpu_custom_call.1} parent=5 // pred_check_branch
        %284 = sbr.rel (%p282) target = $region48
      $region47: #{tpu_custom_call.1} parent=5 // pred_region
        // Predicated region
        $region49: #{tpu_custom_call.1} parent=47 // pred_check
          %p285 = pneg %p63
        $region50: #{tpu_custom_call.1} parent=47 // pred_check_branch
          %287 = sbr.rel (%p285) target = $region52
        $region51: #{tpu_custom_call.1} parent=47 // pred_region
          %s288 = sand.u32 %s53, 1
          %s289 = scalar_lea.sflag [#allocation5], %s288
          %s290 = sand.u32 %s53, 1
          %s291 = smul.addr %s290, 40
          %s292 = scalar_lea.vmem [#allocation4], %s291
          %s294 = ssub.s32 640, 640
          %295 = vsyncadd %s289, %s294
          %s296 = smul.addr %s22, 5
          %s297 = smul.addr %s296, 128
          %s298 = scalar_lea.hbm %s1, %s297
          %s300 = sshll.u32 %s292, 4
          %s301 = int_to_ptr.vmem [resolvable:$true] %s300
          %303 = dma.hbm_to_vmem [thread:$0]  %s298, 640, %s301, %s289
        $region52: #{tpu_custom_call.1} parent=47 // pred_fallthru
          _
      $region48: #{tpu_custom_call.1} parent=5 // pred_fallthru
        _
      %p304 = scmp.le.s32.totalorder 1, %s22
      %p305 = scmp.lt.s32.totalorder %s22, 3
      %p306 = pnand %p304, %p305
      %p307 = pneg %p306
      // Predicated region
      $region53: #{tpu_custom_call.1} parent=5 // pred_check
        _
      $region54: #{tpu_custom_call.1} parent=5 // pred_check_branch
        %309 = sbr.rel (%p306) target = $region56
      $region55: #{tpu_custom_call.1} parent=5 // pred_region
        %s310 = ssub.s32 %s22, 1
        %s311 = sand.u32 %s56, 1
        %s312 = scalar_lea.sflag [#allocation5], %s311
        %s313 = sand.u32 %s56, 1
        %s314 = smul.addr %s313, 40
        %s315 = scalar_lea.vmem [#allocation4], %s314
        // Predicated region
        $region57: #{tpu_custom_call.1} parent=55 // pred_check
          %p316 = pneg %p69
        $region58: #{tpu_custom_call.1} parent=55 // pred_check_branch
          %318 = sbr.rel (%p316) target = $region60
        $region59: #{tpu_custom_call.1} parent=55 // pred_region
          %319 = dma.done %s312, 640
        $region60: #{tpu_custom_call.1} parent=55 // pred_fallthru
          _
        %p320 = pneg %p43
        %p321 = pneg %p40
        %s322 = sand.u32 %s56, 1
        %s323 = scalar_lea.sflag [#allocation5], %s322
        %s324 = sand.u32 %s56, 1
        %s325 = smul.addr %s324, 40
        %s326 = scalar_lea.vmem [#allocation4], %s325
        %p327 = pneg %p69
        %p328 = pneg %p66
        %p329 = pneg %p90
        %p330 = pneg %p87
        %p331 = pneg %p111
        %p332 = pneg %p108
        %p333 = pneg %p132
        %p334 = pneg %p129
        %p335 = pneg %p153
        %p336 = pneg %p150
        %p337 = pneg %p174
        %p338 = pneg %p171
        %p339 = pneg %p195
        %p340 = pneg %p192
        %p341 = pneg %p216
        %p342 = pneg %p213
        %p343 = pneg %p242
        %p344 = pneg %p239
        %s345 = sand.u32 %s229, 1
        %s346 = scalar_lea.sflag [#allocation6], %s345
        %s347 = sand.u32 %s229, 1
        %s348 = smul.addr %s347, 24
        %s349 = scalar_lea.vmem [#allocation7], %s348
        %v351 = vld [vmem:[%s315] sm:$0xff]
        %v352 = vld [vmem:[%s315 + $0x8] sm:$0xff]
        %v353 = vld [vmem:[%s315 + $0x10] sm:$0xff]
        %v354 = vld [vmem:[%s315 + $0x18] sm:$0xff]
        %359 = vrot.lane.b32.xlu0 %v351, 19
        %v360 = vpop.permute.xlu0 %359
        %361 = vrot.lane.b32.xlu0 %v352, 19
        %v362 = vpop.permute.xlu0 %361
        %363 = vrot.lane.b32.xlu0 %v353, 19
        %v364 = vpop.permute.xlu0 %363
        %365 = vrot.lane.b32.xlu0 %v354, 19
        %v366 = vpop.permute.xlu0 %365
        %vm367 = vcmask 154624
        %v368 = vsel %vm367, %v360, %v362
        %v369 = vsel %vm367, %v362, %v364
        %v370 = vsel %vm367, %v364, %v366
        %374 = vst [vmem:[#allocation2] sm:$0xff] %v368
        %375 = vst [vmem:[#allocation2 + $0x8] sm:$0xff] %v369
        %376 = vst [vmem:[#allocation2 + $0x10] sm:$0xff] %v370
        %v377 = vld [vmem:[%s315] sm:$0xff]
        %v378 = vld [vmem:[%s315 + $0x8] sm:$0xff]
        %v379 = vld [vmem:[%s315 + $0x10] sm:$0xff]
        %v380 = vld [vmem:[%s315 + $0x18] sm:$0xff]
        %385 = vrot.lane.b32.xlu0 %v377, 18
        %v386 = vpop.permute.xlu0 %385
        %387 = vrot.lane.b32.xlu0 %v378, 18
        %v388 = vpop.permute.xlu0 %387
        %389 = vrot.lane.b32.xlu0 %v379, 18
        %v390 = vpop.permute.xlu0 %389
        %391 = vrot.lane.b32.xlu0 %v380, 18
        %v392 = vpop.permute.xlu0 %391
        %vm393 = vcmask 146432
        %v394 = vsel %vm393, %v386, %v388
        %v395 = vsel %vm393, %v388, %v390
        %v396 = vsel %vm393, %v390, %v392
        %400 = vst [vmem:[#allocation2 + $0x18] sm:$0xff] %v394
        %401 = vst [vmem:[#allocation2 + $0x20] sm:$0xff] %v395
        %402 = vst [vmem:[#allocation2 + $0x28] sm:$0xff] %v396
        %v403 = vld [vmem:[%s315] sm:$0xff]
        %v404 = vld [vmem:[%s315 + $0x8] sm:$0xff]
        %v405 = vld [vmem:[%s315 + $0x10] sm:$0xff]
        %v406 = vld [vmem:[%s315 + $0x18] sm:$0xff]
        %411 = vrot.lane.b32.xlu0 %v403, 17
        %v412 = vpop.permute.xlu0 %411
        %413 = vrot.lane.b32.xlu0 %v404, 17
        %v414 = vpop.permute.xlu0 %413
        %415 = vrot.lane.b32.xlu0 %v405, 17
        %v416 = vpop.permute.xlu0 %415
        %417 = vrot.lane.b32.xlu0 %v406, 17
        %v418 = vpop.permute.xlu0 %417
        %vm419 = vcmask 138240
        %v420 = vsel %vm419, %v412, %v414
        %v421 = vsel %vm419, %v414, %v416
        %v422 = vsel %vm419, %v416, %v418
        %426 = vst [vmem:[#allocation2 + $0x30] sm:$0xff] %v420
        %427 = vst [vmem:[#allocation2 + $0x38] sm:$0xff] %v421
        %428 = vst [vmem:[#allocation2 + $0x40] sm:$0xff] %v422
        %v429 = vld [vmem:[%s315] sm:$0xff]
        %v430 = vld [vmem:[%s315 + $0x8] sm:$0xff]
        %v431 = vld [vmem:[%s315 + $0x10] sm:$0xff]
        %v432 = vld [vmem:[%s315 + $0x18] sm:$0xff]
        %437 = vrot.lane.b32.xlu0 %v429, 1
        %v438 = vpop.permute.xlu0 %437
        %439 = vrot.lane.b32.xlu0 %v430, 1
        %v440 = vpop.permute.xlu0 %439
        %441 = vrot.lane.b32.xlu0 %v431, 1
        %v442 = vpop.permute.xlu0 %441
        %443 = vrot.lane.b32.xlu0 %v432, 1
        %v444 = vpop.permute.xlu0 %443
        %vm445 = vcmask 7168
        %v446 = vsel %vm445, %v438, %v440
        %v447 = vsel %vm445, %v440, %v442
        %v448 = vsel %vm445, %v442, %v444
        %452 = vst [vmem:[#allocation2 + $0x48] sm:$0xff] %v446
        %453 = vst [vmem:[#allocation2 + $0x50] sm:$0xff] %v447
        %454 = vst [vmem:[#allocation2 + $0x58] sm:$0xff] %v448
        %v455 = vld [vmem:[%s315 + $0x8] sm:$0xff]
        %v456 = vld [vmem:[%s315 + $0x10] sm:$0xff]
        %v457 = vld [vmem:[%s315 + $0x18] sm:$0xff]
        %458 = vst [vmem:[#allocation2 + $0x60] sm:$0xff] %v455
        %459 = vst [vmem:[#allocation2 + $0x68] sm:$0xff] %v456
        %460 = vst [vmem:[#allocation2 + $0x70] sm:$0xff] %v457
        %v461 = vld [vmem:[%s315 + $0x8] sm:$0xff]
        %v462 = vld [vmem:[%s315 + $0x10] sm:$0xff]
        %v463 = vld [vmem:[%s315 + $0x18] sm:$0xff]
        %v464 = vld [vmem:[%s315 + $0x20] sm:$0xff]
        %469 = vrot.lane.b32.xlu0 %v461, 127
        %v470 = vpop.permute.xlu0 %469
        %471 = vrot.lane.b32.xlu0 %v462, 127
        %v472 = vpop.permute.xlu0 %471
        %473 = vrot.lane.b32.xlu0 %v463, 127
        %v474 = vpop.permute.xlu0 %473
        %475 = vrot.lane.b32.xlu0 %v464, 127
        %v476 = vpop.permute.xlu0 %475
        %vm477 = vcmask 1039360
        %v478 = vsel %vm477, %v470, %v472
        %v479 = vsel %vm477, %v472, %v474
        %v480 = vsel %vm477, %v474, %v476
        %484 = vst [vmem:[#allocation2 + $0x78] sm:$0xff] %v478
        %485 = vst [vmem:[#allocation2 + $0x80] sm:$0xff] %v479
        %486 = vst [vmem:[#allocation2 + $0x88] sm:$0xff] %v480
        %v487 = vld [vmem:[%s315 + $0x8] sm:$0xff]
        %v488 = vld [vmem:[%s315 + $0x10] sm:$0xff]
        %v489 = vld [vmem:[%s315 + $0x18] sm:$0xff]
        %v490 = vld [vmem:[%s315 + $0x20] sm:$0xff]
        %495 = vrot.lane.b32.xlu0 %v487, 111
        %v496 = vpop.permute.xlu0 %495
        %497 = vrot.lane.b32.xlu0 %v488, 111
        %v498 = vpop.permute.xlu0 %497
        %499 = vrot.lane.b32.xlu0 %v489, 111
        %v500 = vpop.permute.xlu0 %499
        %501 = vrot.lane.b32.xlu0 %v490, 111
        %v502 = vpop.permute.xlu0 %501
        %vm503 = vcmask 908288
        %v504 = vsel %vm503, %v496, %v498
        %v505 = vsel %vm503, %v498, %v500
        %v506 = vsel %vm503, %v500, %v502
        %510 = vst [vmem:[#allocation2 + $0x90] sm:$0xff] %v504
        %511 = vst [vmem:[#allocation2 + $0x98] sm:$0xff] %v505
        %512 = vst [vmem:[#allocation2 + $0xa0] sm:$0xff] %v506
        %v513 = vld [vmem:[%s315 + $0x8] sm:$0xff]
        %v514 = vld [vmem:[%s315 + $0x10] sm:$0xff]
        %v515 = vld [vmem:[%s315 + $0x18] sm:$0xff]
        %v516 = vld [vmem:[%s315 + $0x20] sm:$0xff]
        %521 = vrot.lane.b32.xlu0 %v513, 110
        %v522 = vpop.permute.xlu0 %521
        %523 = vrot.lane.b32.xlu0 %v514, 110
        %v524 = vpop.permute.xlu0 %523
        %525 = vrot.lane.b32.xlu0 %v515, 110
        %v526 = vpop.permute.xlu0 %525
        %527 = vrot.lane.b32.xlu0 %v516, 110
        %v528 = vpop.permute.xlu0 %527
        %vm529 = vcmask 900096
        %v530 = vsel %vm529, %v522, %v524
        %v531 = vsel %vm529, %v524, %v526
        %v532 = vsel %vm529, %v526, %v528
        %536 = vst [vmem:[#allocation2 + $0xa8] sm:$0xff] %v530
        %537 = vst [vmem:[#allocation2 + $0xb0] sm:$0xff] %v531
        %538 = vst [vmem:[#allocation2 + $0xb8] sm:$0xff] %v532
        %v539 = vld [vmem:[%s315 + $0x8] sm:$0xff]
        %v540 = vld [vmem:[%s315 + $0x10] sm:$0xff]
        %v541 = vld [vmem:[%s315 + $0x18] sm:$0xff]
        %v542 = vld [vmem:[%s315 + $0x20] sm:$0xff]
        %547 = vrot.lane.b32.xlu0 %v539, 109
        %v548 = vpop.permute.xlu0 %547
        %549 = vrot.lane.b32.xlu0 %v540, 109
        %v550 = vpop.permute.xlu0 %549
        %551 = vrot.lane.b32.xlu0 %v541, 109
        %v552 = vpop.permute.xlu0 %551
        %553 = vrot.lane.b32.xlu0 %v542, 109
        %v554 = vpop.permute.xlu0 %553
        %vm555 = vcmask 891904
        %v556 = vsel %vm555, %v548, %v550
        %v557 = vsel %vm555, %v550, %v552
        %v558 = vsel %vm555, %v552, %v554
        %562 = vst [vmem:[#allocation2 + $0xc0] sm:$0xff] %v556
        %563 = vst [vmem:[#allocation2 + $0xc8] sm:$0xff] %v557
        %564 = vst [vmem:[#allocation2 + $0xd0] sm:$0xff] %v558
        %v565 = vlaneseq
        %v566 = vshrl.u32 %v565, 7
        %vm567 = vcmp.eq.s32.totalorder %v566, 0
        %v568 = vsel %vm567, 1.0, 0.0
        %569 = vst [vmem:[#allocation2 + $0xd8] sm:$0xff] %v568
        %570 = vst [vmem:[#allocation2 + $0xe0] sm:$0xff] %v568
        %571 = vst [vmem:[#allocation2 + $0xe8] sm:$0xff] %v568
        %v572 = vld [vmem:[%s2] sm:$0xf]
        %v573 = vld [vmem:[#allocation2] sm:$0xff]
        %v574 = vld [vmem:[#allocation2 + $0x8] sm:$0xff]
        %v575 = vld [vmem:[#allocation2 + $0x10] sm:$0xff]
        %v576 = vld [vmem:[#allocation2 + $0x18] sm:$0xff]
        %v577 = vld [vmem:[#allocation2 + $0x20] sm:$0xff]
        %v578 = vld [vmem:[#allocation2 + $0x28] sm:$0xff]
        %v579 = vld [vmem:[#allocation2 + $0x30] sm:$0xff]
        %v580 = vld [vmem:[#allocation2 + $0x38] sm:$0xff]
        %v581 = vld [vmem:[#allocation2 + $0x40] sm:$0xff]
        %v582 = vld [vmem:[#allocation2 + $0x48] sm:$0xff]
        %v583 = vld [vmem:[#allocation2 + $0x50] sm:$0xff]
        %v584 = vld [vmem:[#allocation2 + $0x58] sm:$0xff]
        %v585 = vld [vmem:[#allocation2 + $0x60] sm:$0xff]
        %v586 = vld [vmem:[#allocation2 + $0x68] sm:$0xff]
        %v587 = vld [vmem:[#allocation2 + $0x70] sm:$0xff]
        %v588 = vld [vmem:[#allocation2 + $0x78] sm:$0xff]
        %v589 = vld [vmem:[#allocation2 + $0x80] sm:$0xff]
        %v590 = vld [vmem:[#allocation2 + $0x88] sm:$0xff]
        %v591 = vld [vmem:[#allocation2 + $0x90] sm:$0xff]
        %v592 = vld [vmem:[#allocation2 + $0x98] sm:$0xff]
        %v593 = vld [vmem:[#allocation2 + $0xa0] sm:$0xff]
        %v594 = vld [vmem:[#allocation2 + $0xa8] sm:$0xff]
        %v595 = vld [vmem:[#allocation2 + $0xb0] sm:$0xff]
        %v596 = vld [vmem:[#allocation2 + $0xb8] sm:$0xff]
        %v597 = vld [vmem:[#allocation2 + $0xc0] sm:$0xff]
        %v598 = vld [vmem:[#allocation2 + $0xc8] sm:$0xff]
        %v599 = vld [vmem:[#allocation2 + $0xd0] sm:$0xff]
        %v600 = vld [vmem:[#allocation2 + $0xd8] sm:$0xff]
        %v601 = vld [vmem:[#allocation2 + $0xe0] sm:$0xff]
        %v602 = vld [vmem:[#allocation2 + $0xe8] sm:$0xff]
        %v603 = vpack.c.bf16 %v576, %v573
        %v604 = vpack.c.bf16 %v577, %v574
        %v605 = vpack.c.bf16 %v578, %v575
        %v606 = vpack.c.bf16 %v582, %v579
        %v607 = vpack.c.bf16 %v583, %v580
        %v608 = vpack.c.bf16 %v584, %v581
        %v609 = vpack.c.bf16 %v588, %v585
        %v610 = vpack.c.bf16 %v589, %v586
        %v611 = vpack.c.bf16 %v590, %v587
        %v612 = vpack.c.bf16 %v594, %v591
        %v613 = vpack.c.bf16 %v595, %v592
        %v614 = vpack.c.bf16 %v596, %v593
        %v615 = vpack.c.bf16 %v600, %v597
        %v616 = vpack.c.bf16 %v601, %v598
        %v617 = vpack.c.bf16 %v602, %v599
        %vm618 = vcmask 654336
        %v620 = vsel %vm618, %v572, 0
        %622 = vmatprep.subr.bf16.mxu0 0
        %623 = vmatpush1.bf16.msra.mxu0 0
        %624 = vmatprep.subr.bf16.mxu0 0
        %625 = vmatpush1.bf16.msra.mxu0 0
        %626 = vmatprep.subr.bf16.mxu0 0
        %627 = vmatpush1.bf16.msra.mxu0 0
        %628 = vmatprep.subr.bf16.mxu0 %v616
        %629 = vmatpush1.bf16.msra.mxu0 %v615
        %630 = vmatprep.subr.bf16.mxu0 %v613
        %631 = vmatpush1.bf16.msra.mxu0 %v612
        %632 = vmatprep.subr.bf16.mxu0 %v610
        %633 = vmatpush1.bf16.msra.mxu0 %v609
        %634 = vmatprep.subr.bf16.mxu0 %v607
        %635 = vmatpush1.bf16.msra.mxu0 %v606
        %636 = vmatprep.subr.bf16.mxu0 %v604
        %637 = vmatpush1.bf16.msra.mxu0 %v603
        %638 = vmatprep.subr.bf16.mxu0 0
        %639 = vmatpush2.bf16.msra.mxu0 0
        %640 = vmatprep.subr.bf16.mxu0 0
        %641 = vmatpush2.bf16.msra.mxu0 0
        %642 = vmatprep.subr.bf16.mxu0 0
        %643 = vmatpush2.bf16.msra.mxu0 0
        %644 = vmatprep.subr.bf16.mxu0 0
        %645 = vmatpush2.bf16.msra.mxu0 0
        %646 = vmatprep.subr.bf16.mxu0 0
        %647 = vmatpush2.bf16.msra.mxu0 0
        %648 = vmatprep.subr.bf16.mxu0 0
        %649 = vmatpush2.bf16.msra.mxu0 0
        %650 = vmatprep.subr.bf16.mxu0 0
        %651 = vmatpush2.bf16.msra.mxu0 0
        %652 = vmatprep.subr.bf16.mxu0 0
        %653 = vmatpush2.bf16.msra.mxu0 0
        %654 = vmatprep.mubr.bf16.mxu0 0
        %655 = vmatmul.mubr.bf16.gmra.mxu0 %v620
        %v656 = vpop.f32.mrf.mxu0
        %v657 = vadd.f32 0.0, %v656
        %v658 = vpop.f32.mrf.mxu0
        %v659 = vadd.f32 0.0, %v658
        %v660 = vpop.f32.mrf.mxu0
        %v661 = vpop.f32.mrf.mxu0
        %662 = vdwg.mxu0
        %663 = vmatprep.subr.bf16.mxu0 0
        %664 = vmatpush1.bf16.msra.mxu0 0
        %665 = vmatprep.subr.bf16.mxu0 0
        %666 = vmatpush1.bf16.msra.mxu0 0
        %667 = vmatprep.subr.bf16.mxu0 0
        %668 = vmatpush1.bf16.msra.mxu0 0
        %669 = vmatprep.subr.bf16.mxu0 0
        %670 = vmatpush1.bf16.msra.mxu0 %v617
        %671 = vmatprep.subr.bf16.mxu0 0
        %672 = vmatpush1.bf16.msra.mxu0 %v614
        %673 = vmatprep.subr.bf16.mxu0 0
        %674 = vmatpush1.bf16.msra.mxu0 %v611
        %675 = vmatprep.subr.bf16.mxu0 0
        %676 = vmatpush1.bf16.msra.mxu0 %v608
        %677 = vmatprep.subr.bf16.mxu0 0
        %678 = vmatpush1.bf16.msra.mxu0 %v605
        %679 = vmatprep.subr.bf16.mxu0 0
        %680 = vmatpush2.bf16.msra.mxu0 0
        %681 = vmatprep.subr.bf16.mxu0 0
        %682 = vmatpush2.bf16.msra.mxu0 0
        %683 = vmatprep.subr.bf16.mxu0 0
        %684 = vmatpush2.bf16.msra.mxu0 0
        %685 = vmatprep.subr.bf16.mxu0 0
        %686 = vmatpush2.bf16.msra.mxu0 0
        %687 = vmatprep.subr.bf16.mxu0 0
        %688 = vmatpush2.bf16.msra.mxu0 0
        %689 = vmatprep.subr.bf16.mxu0 0
        %690 = vmatpush2.bf16.msra.mxu0 0
        %691 = vmatprep.subr.bf16.mxu0 0
        %692 = vmatpush2.bf16.msra.mxu0 0
        %693 = vmatprep.subr.bf16.mxu0 0
        %694 = vmatpush2.bf16.msra.mxu0 0
        %695 = vmatprep.mubr.bf16.mxu0 0
        %696 = vmatmul.mubr.bf16.gmra.mxu0 %v620
        %v697 = vpop.f32.mrf.mxu0
        %v698 = vadd.f32 0.0, %v697
        %v699 = vpop.f32.mrf.mxu0
        %v700 = vpop.f32.mrf.mxu0
        %v701 = vpop.f32.mrf.mxu0
        %702 = vdwg.mxu0
        %v703 = vld [vmem:[%s3] sm:$0xff]
        %v704 = vmul.f32 %v657, %v657
        %v705 = vmul.f32 %v659, %v659
        %v706 = vmul.f32 %v698, %v698
        %vm707 = vcmask 64512
        %v709 = vsel %vm707, %v703, 0
        %711 = vmatprep.subr.mxu0 0.0
        %712 = vmatpush1.msra.mxu0 0.0
        %713 = vmatprep.subr.mxu0 0.0
        %714 = vmatpush1.msra.mxu0 0.0
        %715 = vmatprep.subr.mxu0 0.0
        %716 = vmatpush1.msra.mxu0 0.0
        %717 = vmatprep.subr.mxu0 0.0
        %718 = vmatpush1.msra.mxu0 0.0
        %719 = vmatprep.subr.mxu0 0.0
        %720 = vmatpush1.msra.mxu0 0.0
        %721 = vmatprep.subr.mxu0 0.0
        %722 = vmatpush1.msra.mxu0 0.0
        %723 = vmatprep.subr.mxu0 0.0
        %724 = vmatpush1.msra.mxu0 0.0
        %725 = vmatprep.subr.mxu0 0.0
        %726 = vmatpush1.msra.mxu0 0.0
        %727 = vmatprep.subr.mxu0 0.0
        %728 = vmatpush1.msra.mxu0 0.0
        %729 = vmatprep.subr.mxu0 0.0
        %730 = vmatpush1.msra.mxu0 0.0
        %731 = vmatprep.subr.mxu0 0.0
        %732 = vmatpush1.msra.mxu0 0.0
        %733 = vmatprep.subr.mxu0 0.0
        %734 = vmatpush1.msra.mxu0 0.0
        %735 = vmatprep.subr.mxu0 0.0
        %736 = vmatpush1.msra.mxu0 0.0
        %737 = vmatprep.subr.mxu0 0.0
        %738 = vmatpush1.msra.mxu0 0.0
        %739 = vmatprep.subr.mxu0 0.0
        %740 = vmatpush1.msra.mxu0 0.0
        %741 = vmatprep.subr.mxu0 %v705
        %742 = vmatpush1.msra.mxu0 %v704
        %743 = vmatprep.subr.mxu0 0.0
        %744 = vmatpush2.msra.mxu0 0.0
        %745 = vmatprep.subr.mxu0 0.0
        %746 = vmatpush2.msra.mxu0 0.0
        %747 = vmatprep.subr.mxu0 0.0
        %748 = vmatpush2.msra.mxu0 0.0
        %749 = vmatprep.subr.mxu0 0.0
        %750 = vmatpush2.msra.mxu0 0.0
        %751 = vmatprep.subr.mxu0 0.0
        %752 = vmatpush2.msra.mxu0 0.0
        %753 = vmatprep.subr.mxu0 0.0
        %754 = vmatpush2.msra.mxu0 0.0
        %755 = vmatprep.subr.mxu0 0.0
        %756 = vmatpush2.msra.mxu0 0.0
        %757 = vmatprep.subr.mxu0 0.0
        %758 = vmatpush2.msra.mxu0 0.0
        %759 = vmatprep.subr.mxu0 0.0
        %760 = vmatpush2.msra.mxu0 0.0
        %761 = vmatprep.subr.mxu0 0.0
        %762 = vmatpush2.msra.mxu0 0.0
        %763 = vmatprep.subr.mxu0 0.0
        %764 = vmatpush2.msra.mxu0 0.0
        %765 = vmatprep.subr.mxu0 0.0
        %766 = vmatpush2.msra.mxu0 0.0
        %767 = vmatprep.subr.mxu0 0.0
        %768 = vmatpush2.msra.mxu0 0.0
        %769 = vmatprep.subr.mxu0 0.0
        %770 = vmatpush2.msra.mxu0 0.0
        %771 = vmatprep.subr.mxu0 0.0
        %772 = vmatpush2.msra.mxu0 0.0
        %773 = vmatprep.subr.mxu0 0.0
        %774 = vmatpush2.msra.mxu0 0.0
        %775 = vmatprep.mubr.f32.mxu0 0.0
        %776 = vmatmul.mubr.f32.gmra.mxu0 %v709
        %v777 = vpop.f32.mrf.mxu0
        %v778 = vadd.f32 0.0, %v777
        %v779 = vpop.f32.mrf.mxu0
        %v780 = vadd.f32 0.0, %v779
        %781 = vdwg.mxu0
        %782 = vmatprep.subr.mxu0 0.0
        %783 = vmatpush1.msra.mxu0 0.0
        %784 = vmatprep.subr.mxu0 0.0
        %785 = vmatpush1.msra.mxu0 0.0
        %786 = vmatprep.subr.mxu0 0.0
        %787 = vmatpush1.msra.mxu0 0.0
        %788 = vmatprep.subr.mxu0 0.0
        %789 = vmatpush1.msra.mxu0 0.0
        %790 = vmatprep.subr.mxu0 0.0
        %791 = vmatpush1.msra.mxu0 0.0
        %792 = vmatprep.subr.mxu0 0.0
        %793 = vmatpush1.msra.mxu0 0.0
        %794 = vmatprep.subr.mxu0 0.0
        %795 = vmatpush1.msra.mxu0 0.0
        %796 = vmatprep.subr.mxu0 0.0
        %797 = vmatpush1.msra.mxu0 0.0
        %798 = vmatprep.subr.mxu0 0.0
        %799 = vmatpush1.msra.mxu0 0.0
        %800 = vmatprep.subr.mxu0 0.0
        %801 = vmatpush1.msra.mxu0 0.0
        %802 = vmatprep.subr.mxu0 0.0
        %803 = vmatpush1.msra.mxu0 0.0
        %804 = vmatprep.subr.mxu0 0.0
        %805 = vmatpush1.msra.mxu0 0.0
        %806 = vmatprep.subr.mxu0 0.0
        %807 = vmatpush1.msra.mxu0 0.0
        %808 = vmatprep.subr.mxu0 0.0
        %809 = vmatpush1.msra.mxu0 0.0
        %810 = vmatprep.subr.mxu0 0.0
        %811 = vmatpush1.msra.mxu0 0.0
        %812 = vmatprep.subr.mxu0 0.0
        %813 = vmatpush1.msra.mxu0 %v706
        %814 = vmatprep.subr.mxu0 0.0
        %815 = vmatpush2.msra.mxu0 0.0
        %816 = vmatprep.subr.mxu0 0.0
        %817 = vmatpush2.msra.mxu0 0.0
        %818 = vmatprep.subr.mxu0 0.0
        %819 = vmatpush2.msra.mxu0 0.0
        %820 = vmatprep.subr.mxu0 0.0
        %821 = vmatpush2.msra.mxu0 0.0
        %822 = vmatprep.subr.mxu0 0.0
        %823 = vmatpush2.msra.mxu0 0.0
        %824 = vmatprep.subr.mxu0 0.0
        %825 = vmatpush2.msra.mxu0 0.0
        %826 = vmatprep.subr.mxu0 0.0
        %827 = vmatpush2.msra.mxu0 0.0
        %828 = vmatprep.subr.mxu0 0.0
        %829 = vmatpush2.msra.mxu0 0.0
        %830 = vmatprep.subr.mxu0 0.0
        %831 = vmatpush2.msra.mxu0 0.0
        %832 = vmatprep.subr.mxu0 0.0
        %833 = vmatpush2.msra.mxu0 0.0
        %834 = vmatprep.subr.mxu0 0.0
        %835 = vmatpush2.msra.mxu0 0.0
        %836 = vmatprep.subr.mxu0 0.0
        %837 = vmatpush2.msra.mxu0 0.0
        %838 = vmatprep.subr.mxu0 0.0
        %839 = vmatpush2.msra.mxu0 0.0
        %840 = vmatprep.subr.mxu0 0.0
        %841 = vmatpush2.msra.mxu0 0.0
        %842 = vmatprep.subr.mxu0 0.0
        %843 = vmatpush2.msra.mxu0 0.0
        %844 = vmatprep.subr.mxu0 0.0
        %845 = vmatpush2.msra.mxu0 0.0
        %846 = vmatprep.mubr.f32.mxu0 0.0
        %847 = vmatmul.mubr.f32.gmra.mxu0 %v709
        %v848 = vpop.f32.mrf.mxu0
        %v849 = vadd.f32 0.0, %v848
        %v850 = vpop.f32.mrf.mxu0
        %851 = vdwg.mxu0
        %v852 = vld [vmem:[%s4] sm:$0xff]
        %854 = vset.pattern.permute.xlu0 0
        %855 = vperm.xlu0 %854, %v852
        %v856 = vpop.permute.xlu0 %855
        %v858 = vadd.f32 %v856, %v778
        %v859 = vadd.f32 %v856, %v780
        %v860 = vadd.f32 %v856, %v849
        %v861 = vrsqrt.pop %v858
        %v862 = vrsqrt.pop %v859
        %v863 = vrsqrt.pop %v860
        %v864 = vmul.f32 %v657, %v861
        %v865 = vmul.f32 %v659, %v862
        %v866 = vmul.f32 %v698, %v863
        %s867 = sld [smem:[#allocation3]]
        %vm868 = vcmp.gt.f32.partialorder %v864, 0.0
        %vm869 = vcmp.gt.f32.partialorder %v865, 0.0
        %vm870 = vcmp.gt.f32.partialorder %v866, 0.0
        %v871 = vstv %s867
        %v872 = vmul.f32 %v871, %v864
        %v873 = vmul.f32 %v871, %v865
        %v874 = vmul.f32 %v871, %v866
        %v875 = vsel %vm868, %v864, %v872
        %v876 = vsel %vm869, %v865, %v873
        %v877 = vsel %vm870, %v866, %v874
        %v878 = vld [vmem:[%s5] sm:$0xff]
        %v879 = vld [vmem:[%s6] sm:$0xff]
        %881 = vset.pattern.permute.xlu0 0
        %882 = vperm.xlu0 %881, %v879
        %v883 = vpop.permute.xlu0 %882
        %v886 = vsel %vm707, %v878, 0
        %888 = vmatprep.subr.mxu0 0.0
        %889 = vmatpush1.msra.mxu0 0.0
        %890 = vmatprep.subr.mxu0 0.0
        %891 = vmatpush1.msra.mxu0 0.0
        %892 = vmatprep.subr.mxu0 0.0
        %893 = vmatpush1.msra.mxu0 0.0
        %894 = vmatprep.subr.mxu0 0.0
        %895 = vmatpush1.msra.mxu0 0.0
        %896 = vmatprep.subr.mxu0 0.0
        %897 = vmatpush1.msra.mxu0 0.0
        %898 = vmatprep.subr.mxu0 0.0
        %899 = vmatpush1.msra.mxu0 0.0
        %900 = vmatprep.subr.mxu0 0.0
        %901 = vmatpush1.msra.mxu0 0.0
        %902 = vmatprep.subr.mxu0 0.0
        %903 = vmatpush1.msra.mxu0 0.0
        %904 = vmatprep.subr.mxu0 0.0
        %905 = vmatpush1.msra.mxu0 0.0
        %906 = vmatprep.subr.mxu0 0.0
        %907 = vmatpush1.msra.mxu0 0.0
        %908 = vmatprep.subr.mxu0 0.0
        %909 = vmatpush1.msra.mxu0 0.0
        %910 = vmatprep.subr.mxu0 0.0
        %911 = vmatpush1.msra.mxu0 0.0
        %912 = vmatprep.subr.mxu0 0.0
        %913 = vmatpush1.msra.mxu0 0.0
        %914 = vmatprep.subr.mxu0 0.0
        %915 = vmatpush1.msra.mxu0 0.0
        %916 = vmatprep.subr.mxu0 0.0
        %917 = vmatpush1.msra.mxu0 0.0
        %918 = vmatprep.subr.mxu0 %v876
        %919 = vmatpush1.msra.mxu0 %v875
        %920 = vmatprep.subr.mxu0 0.0
        %921 = vmatpush2.msra.mxu0 0.0
        %922 = vmatprep.subr.mxu0 0.0
        %923 = vmatpush2.msra.mxu0 0.0
        %924 = vmatprep.subr.mxu0 0.0
        %925 = vmatpush2.msra.mxu0 0.0
        %926 = vmatprep.subr.mxu0 0.0
        %927 = vmatpush2.msra.mxu0 0.0
        %928 = vmatprep.subr.mxu0 0.0
        %929 = vmatpush2.msra.mxu0 0.0
        %930 = vmatprep.subr.mxu0 0.0
        %931 = vmatpush2.msra.mxu0 0.0
        %932 = vmatprep.subr.mxu0 0.0
        %933 = vmatpush2.msra.mxu0 0.0
        %934 = vmatprep.subr.mxu0 0.0
        %935 = vmatpush2.msra.mxu0 0.0
        %936 = vmatprep.subr.mxu0 0.0
        %937 = vmatpush2.msra.mxu0 0.0
        %938 = vmatprep.subr.mxu0 0.0
        %939 = vmatpush2.msra.mxu0 0.0
        %940 = vmatprep.subr.mxu0 0.0
        %941 = vmatpush2.msra.mxu0 0.0
        %942 = vmatprep.subr.mxu0 0.0
        %943 = vmatpush2.msra.mxu0 0.0
        %944 = vmatprep.subr.mxu0 0.0
        %945 = vmatpush2.msra.mxu0 0.0
        %946 = vmatprep.subr.mxu0 0.0
        %947 = vmatpush2.msra.mxu0 0.0
        %948 = vmatprep.subr.mxu0 0.0
        %949 = vmatpush2.msra.mxu0 0.0
        %950 = vmatprep.subr.mxu0 0.0
        %951 = vmatpush2.msra.mxu0 0.0
        %952 = vmatprep.mubr.f32.mxu0 0.0
        %953 = vmatmul.mubr.f32.gmra.mxu0 %v886
        %v954 = vpop.f32.mrf.mxu0
        %v955 = vadd.f32 %v883, %v954
        %v956 = vpop.f32.mrf.mxu0
        %v957 = vadd.f32 %v883, %v956
        %958 = vdwg.mxu0
        %959 = vmatprep.subr.mxu0 0.0
        %960 = vmatpush1.msra.mxu0 0.0
        %961 = vmatprep.subr.mxu0 0.0
        %962 = vmatpush1.msra.mxu0 0.0
        %963 = vmatprep.subr.mxu0 0.0
        %964 = vmatpush1.msra.mxu0 0.0
        %965 = vmatprep.subr.mxu0 0.0
        %966 = vmatpush1.msra.mxu0 0.0
        %967 = vmatprep.subr.mxu0 0.0
        %968 = vmatpush1.msra.mxu0 0.0
        %969 = vmatprep.subr.mxu0 0.0
        %970 = vmatpush1.msra.mxu0 0.0
        %971 = vmatprep.subr.mxu0 0.0
        %972 = vmatpush1.msra.mxu0 0.0
        %973 = vmatprep.subr.mxu0 0.0
        %974 = vmatpush1.msra.mxu0 0.0
        %975 = vmatprep.subr.mxu0 0.0
        %976 = vmatpush1.msra.mxu0 0.0
        %977 = vmatprep.subr.mxu0 0.0
        %978 = vmatpush1.msra.mxu0 0.0
        %979 = vmatprep.subr.mxu0 0.0
        %980 = vmatpush1.msra.mxu0 0.0
        %981 = vmatprep.subr.mxu0 0.0
        %982 = vmatpush1.msra.mxu0 0.0
        %983 = vmatprep.subr.mxu0 0.0
        %984 = vmatpush1.msra.mxu0 0.0
        %985 = vmatprep.subr.mxu0 0.0
        %986 = vmatpush1.msra.mxu0 0.0
        %987 = vmatprep.subr.mxu0 0.0
        %988 = vmatpush1.msra.mxu0 0.0
        %989 = vmatprep.subr.mxu0 0.0
        %990 = vmatpush1.msra.mxu0 %v877
        %991 = vmatprep.subr.mxu0 0.0
        %992 = vmatpush2.msra.mxu0 0.0
        %993 = vmatprep.subr.mxu0 0.0
        %994 = vmatpush2.msra.mxu0 0.0
        %995 = vmatprep.subr.mxu0 0.0
        %996 = vmatpush2.msra.mxu0 0.0
        %997 = vmatprep.subr.mxu0 0.0
        %998 = vmatpush2.msra.mxu0 0.0
        %999 = vmatprep.subr.mxu0 0.0
        %1000 = vmatpush2.msra.mxu0 0.0
        %1001 = vmatprep.subr.mxu0 0.0
        %1002 = vmatpush2.msra.mxu0 0.0
        %1003 = vmatprep.subr.mxu0 0.0
        %1004 = vmatpush2.msra.mxu0 0.0
        %1005 = vmatprep.subr.mxu0 0.0
        %1006 = vmatpush2.msra.mxu0 0.0
        %1007 = vmatprep.subr.mxu0 0.0
        %1008 = vmatpush2.msra.mxu0 0.0
        %1009 = vmatprep.subr.mxu0 0.0
        %1010 = vmatpush2.msra.mxu0 0.0
        %1011 = vmatprep.subr.mxu0 0.0
        %1012 = vmatpush2.msra.mxu0 0.0
        %1013 = vmatprep.subr.mxu0 0.0
        %1014 = vmatpush2.msra.mxu0 0.0
        %1015 = vmatprep.subr.mxu0 0.0
        %1016 = vmatpush2.msra.mxu0 0.0
        %1017 = vmatprep.subr.mxu0 0.0
        %1018 = vmatpush2.msra.mxu0 0.0
        %1019 = vmatprep.subr.mxu0 0.0
        %1020 = vmatpush2.msra.mxu0 0.0
        %1021 = vmatprep.subr.mxu0 0.0
        %1022 = vmatpush2.msra.mxu0 0.0
        %1023 = vmatprep.mubr.f32.mxu0 0.0
        %1024 = vmatmul.mubr.f32.gmra.mxu0 %v886
        %v1025 = vpop.f32.mrf.mxu0
        %v1026 = vadd.f32 %v883, %v1025
        %v1027 = vpop.f32.mrf.mxu0
        %1028 = vdwg.mxu0
        %v1029 = vld [vmem:[%s7] sm:$0xff]
        %v1030 = vmul.f32 %v955, %v955
        %v1031 = vmul.f32 %v957, %v957
        %v1032 = vmul.f32 %v1026, %v1026
        %v1034 = vsel %vm707, %v1029, 0
        %1036 = vmatprep.subr.mxu0 0.0
        %1037 = vmatpush1.msra.mxu0 0.0
        %1038 = vmatprep.subr.mxu0 0.0
        %1039 = vmatpush1.msra.mxu0 0.0
        %1040 = vmatprep.subr.mxu0 0.0
        %1041 = vmatpush1.msra.mxu0 0.0
        %1042 = vmatprep.subr.mxu0 0.0
        %1043 = vmatpush1.msra.mxu0 0.0
        %1044 = vmatprep.subr.mxu0 0.0
        %1045 = vmatpush1.msra.mxu0 0.0
        %1046 = vmatprep.subr.mxu0 0.0
        %1047 = vmatpush1.msra.mxu0 0.0
        %1048 = vmatprep.subr.mxu0 0.0
        %1049 = vmatpush1.msra.mxu0 0.0
        %1050 = vmatprep.subr.mxu0 0.0
        %1051 = vmatpush1.msra.mxu0 0.0
        %1052 = vmatprep.subr.mxu0 0.0
        %1053 = vmatpush1.msra.mxu0 0.0
        %1054 = vmatprep.subr.mxu0 0.0
        %1055 = vmatpush1.msra.mxu0 0.0
        %1056 = vmatprep.subr.mxu0 0.0
        %1057 = vmatpush1.msra.mxu0 0.0
        %1058 = vmatprep.subr.mxu0 0.0
        %1059 = vmatpush1.msra.mxu0 0.0
        %1060 = vmatprep.subr.mxu0 0.0
        %1061 = vmatpush1.msra.mxu0 0.0
        %1062 = vmatprep.subr.mxu0 0.0
        %1063 = vmatpush1.msra.mxu0 0.0
        %1064 = vmatprep.subr.mxu0 0.0
        %1065 = vmatpush1.msra.mxu0 0.0
        %1066 = vmatprep.subr.mxu0 %v1031
        %1067 = vmatpush1.msra.mxu0 %v1030
        %1068 = vmatprep.subr.mxu0 0.0
        %1069 = vmatpush2.msra.mxu0 0.0
        %1070 = vmatprep.subr.mxu0 0.0
        %1071 = vmatpush2.msra.mxu0 0.0
        %1072 = vmatprep.subr.mxu0 0.0
        %1073 = vmatpush2.msra.mxu0 0.0
        %1074 = vmatprep.subr.mxu0 0.0
        %1075 = vmatpush2.msra.mxu0 0.0
        %1076 = vmatprep.subr.mxu0 0.0
        %1077 = vmatpush2.msra.mxu0 0.0
        %1078 = vmatprep.subr.mxu0 0.0
        %1079 = vmatpush2.msra.mxu0 0.0
        %1080 = vmatprep.subr.mxu0 0.0
        %1081 = vmatpush2.msra.mxu0 0.0
        %1082 = vmatprep.subr.mxu0 0.0
        %1083 = vmatpush2.msra.mxu0 0.0
        %1084 = vmatprep.subr.mxu0 0.0
        %1085 = vmatpush2.msra.mxu0 0.0
        %1086 = vmatprep.subr.mxu0 0.0
        %1087 = vmatpush2.msra.mxu0 0.0
        %1088 = vmatprep.subr.mxu0 0.0
        %1089 = vmatpush2.msra.mxu0 0.0
        %1090 = vmatprep.subr.mxu0 0.0
        %1091 = vmatpush2.msra.mxu0 0.0
        %1092 = vmatprep.subr.mxu0 0.0
        %1093 = vmatpush2.msra.mxu0 0.0
        %1094 = vmatprep.subr.mxu0 0.0
        %1095 = vmatpush2.msra.mxu0 0.0
        %1096 = vmatprep.subr.mxu0 0.0
        %1097 = vmatpush2.msra.mxu0 0.0
        %1098 = vmatprep.subr.mxu0 0.0
        %1099 = vmatpush2.msra.mxu0 0.0
        %1100 = vmatprep.mubr.f32.mxu0 0.0
        %1101 = vmatmul.mubr.f32.gmra.mxu0 %v1034
        %v1102 = vpop.f32.mrf.mxu0
        %v1103 = vadd.f32 0.0, %v1102
        %v1104 = vpop.f32.mrf.mxu0
        %v1105 = vadd.f32 0.0, %v1104
        %1106 = vdwg.mxu0
        %1107 = vmatprep.subr.mxu0 0.0
        %1108 = vmatpush1.msra.mxu0 0.0
        %1109 = vmatprep.subr.mxu0 0.0
        %1110 = vmatpush1.msra.mxu0 0.0
        %1111 = vmatprep.subr.mxu0 0.0
        %1112 = vmatpush1.msra.mxu0 0.0
        %1113 = vmatprep.subr.mxu0 0.0
        %1114 = vmatpush1.msra.mxu0 0.0
        %1115 = vmatprep.subr.mxu0 0.0
        %1116 = vmatpush1.msra.mxu0 0.0
        %1117 = vmatprep.subr.mxu0 0.0
        %1118 = vmatpush1.msra.mxu0 0.0
        %1119 = vmatprep.subr.mxu0 0.0
        %1120 = vmatpush1.msra.mxu0 0.0
        %1121 = vmatprep.subr.mxu0 0.0
        %1122 = vmatpush1.msra.mxu0 0.0
        %1123 = vmatprep.subr.mxu0 0.0
        %1124 = vmatpush1.msra.mxu0 0.0
        %1125 = vmatprep.subr.mxu0 0.0
        %1126 = vmatpush1.msra.mxu0 0.0
        %1127 = vmatprep.subr.mxu0 0.0
        %1128 = vmatpush1.msra.mxu0 0.0
        %1129 = vmatprep.subr.mxu0 0.0
        %1130 = vmatpush1.msra.mxu0 0.0
        %1131 = vmatprep.subr.mxu0 0.0
        %1132 = vmatpush1.msra.mxu0 0.0
        %1133 = vmatprep.subr.mxu0 0.0
        %1134 = vmatpush1.msra.mxu0 0.0
        %1135 = vmatprep.subr.mxu0 0.0
        %1136 = vmatpush1.msra.mxu0 0.0
        %1137 = vmatprep.subr.mxu0 0.0
        %1138 = vmatpush1.msra.mxu0 %v1032
        %1139 = vmatprep.subr.mxu0 0.0
        %1140 = vmatpush2.msra.mxu0 0.0
        %1141 = vmatprep.subr.mxu0 0.0
        %1142 = vmatpush2.msra.mxu0 0.0
        %1143 = vmatprep.subr.mxu0 0.0
        %1144 = vmatpush2.msra.mxu0 0.0
        %1145 = vmatprep.subr.mxu0 0.0
        %1146 = vmatpush2.msra.mxu0 0.0
        %1147 = vmatprep.subr.mxu0 0.0
        %1148 = vmatpush2.msra.mxu0 0.0
        %1149 = vmatprep.subr.mxu0 0.0
        %1150 = vmatpush2.msra.mxu0 0.0
        %1151 = vmatprep.subr.mxu0 0.0
        %1152 = vmatpush2.msra.mxu0 0.0
        %1153 = vmatprep.subr.mxu0 0.0
        %1154 = vmatpush2.msra.mxu0 0.0
        %1155 = vmatprep.subr.mxu0 0.0
        %1156 = vmatpush2.msra.mxu0 0.0
        %1157 = vmatprep.subr.mxu0 0.0
        %1158 = vmatpush2.msra.mxu0 0.0
        %1159 = vmatprep.subr.mxu0 0.0
        %1160 = vmatpush2.msra.mxu0 0.0
        %1161 = vmatprep.subr.mxu0 0.0
        %1162 = vmatpush2.msra.mxu0 0.0
        %1163 = vmatprep.subr.mxu0 0.0
        %1164 = vmatpush2.msra.mxu0 0.0
        %1165 = vmatprep.subr.mxu0 0.0
        %1166 = vmatpush2.msra.mxu0 0.0
        %1167 = vmatprep.subr.mxu0 0.0
        %1168 = vmatpush2.msra.mxu0 0.0
        %1169 = vmatprep.subr.mxu0 0.0
        %1170 = vmatpush2.msra.mxu0 0.0
        %1171 = vmatprep.mubr.f32.mxu0 0.0
        %1172 = vmatmul.mubr.f32.gmra.mxu0 %v1034
        %v1173 = vpop.f32.mrf.mxu0
        %v1174 = vadd.f32 0.0, %v1173
        %v1175 = vpop.f32.mrf.mxu0
        %1176 = vdwg.mxu0
        %v1177 = vld [vmem:[%s8] sm:$0xff]
        %1179 = vset.pattern.permute.xlu0 0
        %1180 = vperm.xlu0 %1179, %v1177
        %v1181 = vpop.permute.xlu0 %1180
        %v1183 = vadd.f32 %v1181, %v1103
        %v1184 = vadd.f32 %v1181, %v1105
        %v1185 = vadd.f32 %v1181, %v1174
        %v1186 = vrsqrt.pop %v1183
        %v1187 = vrsqrt.pop %v1184
        %v1188 = vrsqrt.pop %v1185
        %v1189 = vmul.f32 %v955, %v1186
        %v1190 = vmul.f32 %v957, %v1187
        %v1191 = vmul.f32 %v1026, %v1188
        %v1192 = vld [vmem:[%s315 + $0x8] sm:$0xff]
        %v1193 = vld [vmem:[%s315 + $0x10] sm:$0xff]
        %v1194 = vld [vmem:[%s315 + $0x18] sm:$0xff]
        %v1195 = vadd.f32 %v1189, %v1192
        %v1196 = vadd.f32 %v1190, %v1193
        %v1197 = vadd.f32 %v1191, %v1194
        %vm1198 = vcmp.gt.f32.partialorder %v1195, 0.0
        %vm1199 = vcmp.gt.f32.partialorder %v1196, 0.0
        %vm1200 = vcmp.gt.f32.partialorder %v1197, 0.0
        %v1201 = vmul.f32 %v871, %v1195
        %v1202 = vmul.f32 %v871, %v1196
        %v1203 = vmul.f32 %v871, %v1197
        %v1204 = vsel %vm1198, %v1195, %v1201
        %v1205 = vsel %vm1199, %v1196, %v1202
        %v1206 = vsel %vm1200, %v1197, %v1203
        %1207 = vst [vmem:[%s349] sm:$0xff] %v1204
        %1208 = vst [vmem:[%s349 + $0x8] sm:$0xff] %v1205
        %1209 = vst [vmem:[%s349 + $0x10] sm:$0xff] %v1206
        %s1210 = sand.u32 %s229, 1
        %s1211 = scalar_lea.sflag [#allocation6], %s1210
        %s1212 = sand.u32 %s229, 1
        %s1213 = smul.addr %s1212, 24
        %s1214 = scalar_lea.vmem [#allocation7], %s1213
        // Predicated region
        $region61: #{tpu_custom_call.1} parent=55 // pred_check
          %p1215 = pneg %p239
        $region62: #{tpu_custom_call.1} parent=55 // pred_check_branch
          %1217 = sbr.rel (%p1215) target = $region64
        $region63: #{tpu_custom_call.1} parent=55 // pred_region
          %s1219 = ssub.s32 384, 384
          %1220 = vsyncadd %s1211, %s1219
          %s1221 = smul.addr %s27, 3
          %s1222 = smul.addr %s1221, 128
          %s1223 = scalar_lea.hbm %s9, %s1222
          %s1225 = sshll.u32 %s1214, 4
          %s1226 = int_to_ptr.vmem [resolvable:$true] %s1225
          %1228 = dma.vmem_to_hbm [thread:$0]  %s1226, 384, %s1223, %s1211
        $region64: #{tpu_custom_call.1} parent=55 // pred_fallthru
          _
      $region56: #{tpu_custom_call.1} parent=5 // pred_fallthru
        _
      %p1229 = scmp.le.s32.totalorder 2, %s22
      // Predicated region
      $region65: #{tpu_custom_call.1} parent=5 // pred_check
        %p1230 = pneg %p1229
      $region66: #{tpu_custom_call.1} parent=5 // pred_check_branch
        %1232 = sbr.rel (%p1230) target = $region68
      $region67: #{tpu_custom_call.1} parent=5 // pred_region
        %s1233 = ssub.s32 %s22, 2
        // Predicated region
        $region69: #{tpu_custom_call.1} parent=67 // pred_check
          %p1234 = pneg %p245
        $region70: #{tpu_custom_call.1} parent=67 // pred_check_branch
          %1236 = sbr.rel (%p1234) target = $region72
        $region71: #{tpu_custom_call.1} parent=67 // pred_region
          %s1237 = sand.u32 %s230, 1
          %s1238 = scalar_lea.sflag [#allocation6], %s1237
          %s1239 = sand.u32 %s230, 1
          %s1240 = smul.addr %s1239, 24
          %s1241 = scalar_lea.vmem [#allocation7], %s1240
          %1242 = dma.done %s1238, 384
        $region72: #{tpu_custom_call.1} parent=67 // pred_fallthru
          _
      $region68: #{tpu_custom_call.1} parent=5 // pred_fallthru
        _
    $region6: #{tpu_custom_call.1} parent=1 // loop_footer
      %s26 = sadd.s32 1, %s22
    $region7: #{tpu_custom_call.1} parent=1 // loop_footer_branch
      %21 = sbr.rel target = $region3
    $region8: #{tpu_custom_call.1} parent=1 // loop_exit
      _
    %1243 = vsyncpa [#allocation5], 1
    %s1244 = scalar_lea.sflag [#allocation5], 1
    %1245 = vsyncpa %s1244, 1
    %1246 = vsyncpa [#allocation6], 1
    %s1247 = scalar_lea.sflag [#allocation6], 1
    %1248 = vsyncpa %s1247, 1

</llo_original>
